<compile_context>
chip_gen: v5e
topology: v5e:2x2
jax: 0.10.0
libtpu: 0.0.40
codegen_flags: <defaults>
</compile_context>

<pallas_src>
import functools
import numpy as np
import jax
import jax.numpy as jnp
from jax import lax
from jax.experimental import pallas as pl
from jax.experimental.pallas import tpu as pltpu


# ------------------------- in-kernel helpers (pure jnp on values) -------------------------

def _layernorm(x, gamma, beta, eps=1e-5):
    mean = jnp.mean(x, axis=-1, keepdims=True)
    var = jnp.mean((x - mean) ** 2, axis=-1, keepdims=True)
    return (x - mean) * lax.rsqrt(var + eps) * gamma + beta


def _mha_fcout(qz, kz, vz, keep, wfc, bfc, *, heads, bb, mxu_dtype, approx_recip):
    """Multi-head attention + fc_out projection.

    qz, kz, vz : (heads*bb, L, hd) in mxu_dtype, z = h*bb + b (head-major layout,
                 produced by the wrapper for HBM-resident operands).
    keep       : None, or bool array broadcastable to (heads?, bb?, Lq, Lk)
                 (True = keep, False = mask to -1e20).  Never head-replicated.
    wfc        : (heads, hd, E) fc_out weight (head-major reshape done in the wrapper).
    Returns (bb*Lq, E) f32.
    """
    Z, Lq, hd = qz.shape
    Lk = kz.shape[1]

    # All-head scores in one batched matmul (f32 accumulation on the MXU).
    scores = jnp.einsum('zqd,zkd->zqk', qz, kz,
                        preferred_element_type=jnp.float32)          # (H*bb, Lq, Lk)

    if keep is not None:
        # Broadcast the mask over the head axis (free at the vreg level);
        # no H-fold replication, no int8->f32 cast.
        s4 = scores.reshape(heads, bb, Lq, Lk)
        s4 = jnp.where(keep, s4, jnp.float32(-1e20))
        scores = s4.reshape(heads * bb, Lq, Lk)

    # Numerically-stable softmax over k, in f32 on the VPU/EUP.
    # TODO(synk): at realistic L, replace with a flash-style online softmax over KV
    #             tiles instead of materializing (H*bb, Lq, Lk) scores.
    scores = scores - jnp.max(scores, axis=-1, keepdims=True)
    p = jnp.exp(scores)
    p = p * pl.reciprocal(jnp.sum(p, axis=-1, keepdims=True), approx=approx_recip)

    # Attention-weighted values, all heads in one batched matmul.
    ctx = jnp.einsum('zqk,zkd->zqd', p.astype(mxu_dtype), vz,
                     preferred_element_type=jnp.float32)             # (H*bb, Lq, hd)

    # fc_out(concat_h ctx_h) == sum_h ctx_h @ W_fc[h]: one batched dot_general over the
    # head axis + a leading-axis sum (no per-head Python loop, no lane concat).
    ctx_h = ctx.reshape(heads, bb * Lq, hd)                          # leading reshape
    proj = jnp.einsum('hmd,hde->hme', ctx_h.astype(mxu_dtype), wfc,
                      preferred_element_type=jnp.float32)            # (H, bb*Lq, E)
    return jnp.sum(proj, axis=0) + bfc                               # (bb*Lq, E)


# ---------------------------------- Pallas kernel --------------------------------------

def decoder_block_kernel(*refs, heads, head_dim, embed_size, mxu_dtype,
                         approx_recip, has_trg_mask, has_src_mask):
    refs = list(refs)
    o_ref = refs.pop()                        # output ref is last
    it = iter(refs)
    x_ref = next(it)                          # (bb, L, E) f32 (residual path)
    xh_ref = next(it)                         # (H, bb, L, hd) mxu_dtype (attn-1 q/k/v)
    kh_ref = next(it)                         # (H, bb, L, hd) mxu_dtype (attn-2 k)
    vh_ref = next(it)                         # (H, bb, L, hd) mxu_dtype (attn-2 v)
    tmask_ref = next(it) if has_trg_mask else None   # (bb, L, L) int8, or None (causal)
    smask_ref = next(it) if has_src_mask else None   # (bb, L, L) int8, or None (no mask)
    (wfc1_ref, bfc1_ref, g0_ref, b0_ref,
     wfc2_ref, bfc2_ref, g1_ref, b1_ref,
     w1_ref, bf1_ref, w2_ref, bf2_ref, g2_ref, b2_ref) = it

    bb, L, E = x_ref.shape
    scale = 1.0 / (embed_size ** 0.5)
    attn_kw = dict(heads=heads, bb=bb, mxu_dtype=mxu_dtype, approx_recip=approx_recip)

    def mm(a, b):  # MXU matmul: activations cast to MXU dtype, f32 accumulation
        return jnp.dot(a.astype(mxu_dtype), b, preferred_element_type=jnp.float32)

    # --- DecoderBlock.attention: masked self-attention over x, residual, layernorm ---
    xz = xh_ref[...].reshape(heads * bb, L, head_dim)   # leading collapse only
    qz1 = xz * scale                                    # scale folded into Q
    if has_trg_mask:
        keep_t = (tmask_ref[...] != 0)[None]            # (1, bb, L, L) bool
    else:
        # Causal mask generated in-kernel: zero HBM traffic for trg_mask.
        row = lax.broadcasted_iota(jnp.int32, (L, L), 0)
        col = lax.broadcasted_iota(jnp.int32, (L, L), 1)
        keep_t = (row >= col)[None, None]               # (1, 1, L, L) bool
    a1 = _mha_fcout(qz1, xz, xz, keep_t, wfc1_ref[...], bfc1_ref[...], **attn_kw)

    xf = x_ref[...].reshape(bb * L, E)                  # per-token rows
    qf = _layernorm(a1 + xf, g0_ref[...], b0_ref[...])  # dropout = identity (eval)

    # --- TransformerBlock.attention(query, key, value), residual, layernorm ---
    # The query is computed in-kernel, so it is the single remaining in-kernel head
    # split (static lane slices + leading concat); all other operands arrive head-major.
    q3 = qf.reshape(bb, L, E)
    qz2 = jnp.concatenate(
        [q3[:, :, h * head_dim:(h + 1) * head_dim] for h in range(heads)], axis=0)
    qz2 = (qz2 * scale).astype(mxu_dtype)
    kz2 = kh_ref[...].reshape(heads * bb, L, head_dim)
    vz2 = vh_ref[...].reshape(heads * bb, L, head_dim)
    keep_s = (smask_ref[...] != 0)[None] if has_src_mask else None
    a2 = _mha_fcout(qz2, kz2, vz2, keep_s, wfc2_ref[...], bfc2_ref[...], **attn_kw)

    h1 = _layernorm(qf + a2, g1_ref[...], b1_ref[...])

    # --- FFN: Linear(E->F) -> ReLU -> Linear(F->E), residual, layernorm ---
    # TODO(synk): at realistic E/F, K-tile these matmuls over a grid reduction axis with
    #             a VMEM f32 accumulator, and row-tile this whole per-token chain so the
    #             (B*L, F) intermediate never lives as a full f32 slab (v7x: 64 MiB VMEM).
    ffh = jnp.maximum(mm(h1, w1_ref[...]) + bf1_ref[...], 0.0)
    ff = mm(ffh, w2_ref[...]) + bf2_ref[...]
    out = _layernorm(h1 + ff, g2_ref[...], b2_ref[...])

    # E=32 (<128 lanes) -> lane-masked store at this toy size; at E>=128 this store is
    # naturally lane-dense.  A wrapper-side (B, L*E) lane-dense slab is the lever for
    # production E<128 (kept out of the kernel's XLU budget).
    o_ref[...] = out.reshape(bb, L, E)


# ------------------------------------- wrapper ------------------------------------------

def decoder_block(x, value, key, src_mask, trg_mask, params, *,
                  embed_size, heads, forward_expansion,
                  batch_block=None, mxu_dtype=jnp.float32, approx_recip=None):
    """trg_mask=None -> causal mask generated in-kernel; src_mask=None -> no masking."""
    N, L, E = x.shape
    assert E == embed_size and embed_size % heads == 0
    assert value.shape == x.shape and key.shape == x.shape  # same-length toy case
    F = int(forward_expansion * embed_size)
    hd = embed_size // heads

    # v7x has 2 TensorCores: keep >=2 parallel grid steps (never collapse to grid=(1,)).
    if batch_block is None:
        batch_block = max(1, N // 2)
    assert N % batch_block == 0
    nb = N // batch_block

    if approx_recip is None:
        # EUP approximate reciprocal only on the reduced-precision MXU path.
        approx_recip = bool(jnp.dtype(mxu_dtype) != jnp.dtype(jnp.float32))

    # Head-major (H, N, L, hd) copies built once in XLA (outside the kernel) and
    # pre-cast to the MXU dtype: no in-kernel head shuffles, and half the DMA in bf16.
    def to_heads(t):
        return jnp.transpose(t.reshape(N, L, heads, hd), (2, 0, 1, 3)).astype(mxu_dtype)

    xh = to_heads(x)
    kh = to_heads(key)      # TransformerBlock attention: keys come from `key`
    vh = to_heads(value)    #                             values come from `value`

    has_trg = trg_mask is not None
    has_src = src_mask is not None

    seq_spec = pl.BlockSpec((batch_block, L, E), lambda i: (i, 0, 0))
    head_spec = pl.BlockSpec((heads, batch_block, L, hd), lambda i: (0, i, 0, 0))
    mask_spec = pl.BlockSpec((batch_block, L, L), lambda i: (i, 0, 0))

    def wspec(shape):
        # Constant-index weight blocks: single-buffer them (no pointless double-buffer).
        idx = lambda i, _nd=len(shape): (0,) * _nd
        try:
            return pl.BlockSpec(shape, idx, pipeline_mode=pl.Buffered(1))
        except (TypeError, AttributeError):   # older API without pipeline_mode
            return pl.BlockSpec(shape, idx)

    args = [x, xh, kh, vh]
    in_specs = [seq_spec, head_spec, head_spec, head_spec]
    if has_trg:   # compact int8 {0,1} mask (4x less DMA than f32), robust != 0 test
        args.append((trg_mask != 0).astype(jnp.int8)); in_specs.append(mask_spec)
    if has_src:
        args.append((src_mask != 0).astype(jnp.int8)); in_specs.append(mask_spec)

    # Matmul weights pre-cast to the MXU dtype (halves their DMA in bf16); fc_out weight
    # pre-reshaped head-major (H, hd, E) so the kernel's fused projection needs no
    # relayout.  Biases / layernorm params stay f32.
    # TODO(synk): on v7x, fp8 (not int8) is the weight-quantization option for DMA/VMEM.
    wfc1 = params["wfc1"].reshape(heads, hd, embed_size).astype(mxu_dtype)
    wfc2 = params["wfc2"].reshape(heads, hd, embed_size).astype(mxu_dtype)
    w1 = params["w1"].astype(mxu_dtype)
    w2 = params["w2"].astype(mxu_dtype)

    args += [wfc1, params["bfc1"], params["g0"], params["b0"],
             wfc2, params["bfc2"], params["g1"], params["b1"],
             w1, params["bf1"], w2, params["bf2"], params["g2"], params["b2"]]
    in_specs += [wspec((heads, hd, E)), wspec((1, E)), wspec((1, E)), wspec((1, E)),
                 wspec((heads, hd, E)), wspec((1, E)), wspec((1, E)), wspec((1, E)),
                 wspec((E, F)), wspec((1, F)), wspec((F, E)), wspec((1, E)),
                 wspec((1, E)), wspec((1, E))]

    kernel = functools.partial(
        decoder_block_kernel, heads=heads, head_dim=hd, embed_size=embed_size,
        mxu_dtype=mxu_dtype, approx_recip=approx_recip,
        has_trg_mask=has_trg, has_src_mask=has_src)

    return pl.pallas_call(
        kernel,
        out_shape=jax.ShapeDtypeStruct((N, L, E), jnp.float32),
        grid_spec=pltpu.PrefetchScalarGridSpec(
            num_scalar_prefetch=0,
            grid=(nb,),
            in_specs=in_specs,
            out_specs=seq_spec,
        ),
        compiler_params=pltpu.CompilerParams(
            dimension_semantics=("parallel",),
            vmem_limit_bytes=32 * 1024 * 1024,   # explicit; safe on v5e/v6e/v7x
        ),
    )(*args)


# ------------------------------- pure-JAX reference -------------------------------------

def decoder_block_ref(x, value, key, src_mask, trg_mask, params, *, embed_size, heads):
    N, L, E = x.shape
    hd = E // heads

    def attn(q, k, v, mask, w, b):
        qh = q.reshape(N, -1, heads, hd)
        kh = k.reshape(N, -1, heads, hd)
        vh = v.reshape(N, -1, heads, hd)
        corr = jnp.einsum('nqhd,nkhd->nhqk', qh, kh)
        corr = jnp.where(mask[:, None, :, :] == 0, jnp.float32(-1e20), corr)
        att = jax.nn.softmax(corr / (embed_size ** 0.5), axis=3)
        out = jnp.einsum('nhqk,nkhd->nqhd', att, vh).reshape(N, -1, E)
        return out @ w + b

    a1 = attn(x, x, x, trg_mask, params["wfc1"], params["bfc1"])
    query = _layernorm(a1 + x, params["g0"], params["b0"])
    a2 = attn(query, key, value, src_mask, params["wfc2"], params["bfc2"])
    h1 = _layernorm(query + a2, params["g1"], params["b1"])
    ff = jnp.maximum(h1 @ params["w1"] + params["bf1"], 0.0) @ params["w2"] + params["bf2"]
    return _layernorm(h1 + ff, params["g2"], params["b2"])


# ---------------------------------------- main ------------------------------------------

if __name__ == "__main__":
    N, L = 2, 8
    embed_size, heads, forward_expansion = 32, 4, 4
    F = forward_expansion * embed_size

    key0 = jax.random.PRNGKey(0)
    keys = jax.random.split(key0, 16)

    def init(k, shape, scale=0.05):
        return (scale * jax.random.normal(k, shape)).astype(jnp.float32)

    params = {
        # Linear weights stored as (in, out) so the kernel computes x @ W + b.
        "wfc1": init(keys[0], (embed_size, embed_size)),
        "bfc1": init(keys[1], (1, embed_size)),
        "g0": jnp.ones((1, embed_size), jnp.float32),
        "b0": jnp.zeros((1, embed_size), jnp.float32),
        "wfc2": init(keys[2], (embed_size, embed_size)),
        "bfc2": init(keys[3], (1, embed_size)),
        "g1": jnp.ones((1, embed_size), jnp.float32),
        "b1": jnp.zeros((1, embed_size), jnp.float32),
        "w1": init(keys[4], (embed_size, F)),
        "bf1": init(keys[5], (1, F)),
        "w2": init(keys[6], (F, embed_size)),
        "bf2": init(keys[7], (1, embed_size)),
        "g2": jnp.ones((1, embed_size), jnp.float32),
        "b2": jnp.zeros((1, embed_size), jnp.float32),
    }

    x = init(keys[8], (N, L, embed_size), scale=1.0)
    value = init(keys[9], (N, L, embed_size), scale=1.0)
    enc_key = init(keys[10], (N, L, embed_size), scale=1.0)

    trg_mask = jnp.broadcast_to(jnp.tril(jnp.ones((L, L), jnp.float32)), (N, L, L))
    src_mask = jnp.ones((N, L, L), jnp.float32)

    ref = decoder_block_ref(x, value, enc_key, src_mask, trg_mask, params,
                            embed_size=embed_size, heads=heads)

    # General path: explicit DMA'd masks, f32 MXU operands, exact softmax reciprocal.
    out_f32 = decoder_block(x, value, enc_key, src_mask, trg_mask, params,
                            embed_size=embed_size, heads=heads,
                            forward_expansion=forward_expansion,
                            mxu_dtype=jnp.float32)
    out_f32 = jax.block_until_ready(out_f32)
    np.testing.assert_allclose(np.asarray(out_f32), np.asarray(ref),
                               atol=5e-4, rtol=5e-4)

    # Optimized path: causal trg mask generated in-kernel (no mask DMA), no src mask,
    # bf16 MXU operands with f32 accumulation, approximate EUP reciprocal in softmax.
    out_fast = decoder_block(x, value, enc_key, None, None, params,
                             embed_size=embed_size, heads=heads,
                             forward_expansion=forward_expansion,
                             mxu_dtype=jnp.bfloat16)
    out_fast = jax.block_until_ready(out_fast)
    np.testing.assert_allclose(np.asarray(out_fast), np.asarray(ref),
                               atol=5e-2, rtol=5e-2)

    print("KERNEL_OK")
</pallas_src>

<mosaic_0001>
module attributes {stable_mosaic.version = 11 : i64} {
  func.func @decoder_block_kernel(%arg0: i32, %arg1: memref<1x8x32xf32, #tpu.memory_space<vmem>>, %arg2: memref<4x1x8x8xf32, #tpu.memory_space<vmem>>, %arg3: memref<4x1x8x8xf32, #tpu.memory_space<vmem>>, %arg4: memref<4x1x8x8xf32, #tpu.memory_space<vmem>>, %arg5: memref<1x8x8xi8, #tpu.memory_space<vmem>>, %arg6: memref<1x8x8xi8, #tpu.memory_space<vmem>>, %arg7: memref<4x8x32xf32, #tpu.memory_space<vmem>>, %arg8: memref<1x32xf32, #tpu.memory_space<vmem>>, %arg9: memref<1x32xf32, #tpu.memory_space<vmem>>, %arg10: memref<1x32xf32, #tpu.memory_space<vmem>>, %arg11: memref<4x8x32xf32, #tpu.memory_space<vmem>>, %arg12: memref<1x32xf32, #tpu.memory_space<vmem>>, %arg13: memref<1x32xf32, #tpu.memory_space<vmem>>, %arg14: memref<1x32xf32, #tpu.memory_space<vmem>>, %arg15: memref<32x128xf32, #tpu.memory_space<vmem>>, %arg16: memref<1x128xf32, #tpu.memory_space<vmem>>, %arg17: memref<128x32xf32, #tpu.memory_space<vmem>>, %arg18: memref<1x32xf32, #tpu.memory_space<vmem>>, %arg19: memref<1x32xf32, #tpu.memory_space<vmem>>, %arg20: memref<1x32xf32, #tpu.memory_space<vmem>>, %arg21: memref<1x8x32xf32, #tpu.memory_space<vmem>>) attributes {dimension_semantics = [#tpu.dimension_semantics<parallel>], iteration_bounds = array<i64: 2>, scalar_prefetch = 0 : i64, scratch_operands = 0 : i64, tpu.core_type = #tpu.core_type<tc>, window_params = [{transform_indices = @transform_0, window_bounds = array<i64: 1, 8, 32>}, {transform_indices = @transform_1, window_bounds = array<i64: 4, 1, 8, 8>}, {transform_indices = @transform_2, window_bounds = array<i64: 4, 1, 8, 8>}, {transform_indices = @transform_3, window_bounds = array<i64: 4, 1, 8, 8>}, {transform_indices = @transform_4, window_bounds = array<i64: 1, 8, 8>}, {transform_indices = @transform_5, window_bounds = array<i64: 1, 8, 8>}, {pipeline_mode = #tpu.pipeline_mode<synchronous>, transform_indices = @transform_6, window_bounds = array<i64: 4, 8, 32>}, {pipeline_mode = #tpu.pipeline_mode<synchronous>, transform_indices = @transform_7, window_bounds = array<i64: 1, 32>}, {pipeline_mode = #tpu.pipeline_mode<synchronous>, transform_indices = @transform_8, window_bounds = array<i64: 1, 32>}, {pipeline_mode = #tpu.pipeline_mode<synchronous>, transform_indices = @transform_9, window_bounds = array<i64: 1, 32>}, {pipeline_mode = #tpu.pipeline_mode<synchronous>, transform_indices = @transform_10, window_bounds = array<i64: 4, 8, 32>}, {pipeline_mode = #tpu.pipeline_mode<synchronous>, transform_indices = @transform_11, window_bounds = array<i64: 1, 32>}, {pipeline_mode = #tpu.pipeline_mode<synchronous>, transform_indices = @transform_12, window_bounds = array<i64: 1, 32>}, {pipeline_mode = #tpu.pipeline_mode<synchronous>, transform_indices = @transform_13, window_bounds = array<i64: 1, 32>}, {pipeline_mode = #tpu.pipeline_mode<synchronous>, transform_indices = @transform_14, window_bounds = array<i64: 32, 128>}, {pipeline_mode = #tpu.pipeline_mode<synchronous>, transform_indices = @transform_15, window_bounds = array<i64: 1, 128>}, {pipeline_mode = #tpu.pipeline_mode<synchronous>, transform_indices = @transform_16, window_bounds = array<i64: 128, 32>}, {pipeline_mode = #tpu.pipeline_mode<synchronous>, transform_indices = @transform_17, window_bounds = array<i64: 1, 32>}, {pipeline_mode = #tpu.pipeline_mode<synchronous>, transform_indices = @transform_18, window_bounds = array<i64: 1, 32>}, {pipeline_mode = #tpu.pipeline_mode<synchronous>, transform_indices = @transform_19, window_bounds = array<i64: 1, 32>}, {transform_indices = @transform_20, window_bounds = array<i64: 1, 8, 32>}]} {
    %c0 = arith.constant 0 : index
    %c0_0 = arith.constant 0 : index
    %c0_1 = arith.constant 0 : index
    %c0_2 = arith.constant 0 : index
    %0 = vector.load %arg2[%c0, %c0_0, %c0_1, %c0_2] : memref<4x1x8x8xf32, #tpu.memory_space<vmem>>, vector<4x1x8x8xf32>
    %1 = vector.shape_cast %0 : vector<4x1x8x8xf32> to vector<4x8x8xf32>
    %cst = arith.constant 0.176776692 : f32
    %2 = vector.broadcast %cst : f32 to vector<4x8x8xf32>
    %3 = arith.mulf %1, %2 : vector<4x8x8xf32>
    %c0_3 = arith.constant 0 : index
    %c0_4 = arith.constant 0 : index
    %c0_5 = arith.constant 0 : index
    %4 = vector.load %arg5[%c0_3, %c0_4, %c0_5] : memref<1x8x8xi8, #tpu.memory_space<vmem>>, vector<1x8x8xi8>
    %c0_i8 = arith.constant 0 : i8
    %5 = vector.broadcast %c0_i8 : i8 to vector<1x8x8xi8>
    %6 = arith.cmpi ne, %4, %5 : vector<1x8x8xi8>
    %7 = vector.shape_cast %6 : vector<1x8x8xi1> to vector<1x1x8x8xi1>
    %c0_6 = arith.constant 0 : index
    %c0_7 = arith.constant 0 : index
    %c0_8 = arith.constant 0 : index
    %8 = vector.load %arg7[%c0_6, %c0_7, %c0_8] : memref<4x8x32xf32, #tpu.memory_space<vmem>>, vector<4x8x32xf32>
    %c0_9 = arith.constant 0 : index
    %c0_10 = arith.constant 0 : index
    %9 = vector.load %arg8[%c0_9, %c0_10] : memref<1x32xf32, #tpu.memory_space<vmem>>, vector<1x32xf32>
    "tpu.trace_start"() <{level = 10 : i32, message = "zqd,zkd->zqk"}> : () -> ()
    %cst_11 = arith.constant dense<0.000000e+00> : vector<4x8x8xf32>
    %10 = tpu.matmul %3, %1, %cst_11 {dimension_numbers = #tpu.dot_dimension_numbers<[2], [2], [1], [1], [0, 0, 0, 1, 1, 1], [0], [0]>} : vector<4x8x8xf32>, vector<4x8x8xf32>, vector<4x8x8xf32> -> vector<4x8x8xf32>
    "tpu.trace_stop"() : () -> ()
    %11 = vector.shape_cast %10 : vector<4x8x8xf32> to vector<4x1x8x8xf32>
    %cst_12 = arith.constant -1.000000e+20 : f32
    %12 = vector.shape_cast %7 : vector<1x1x8x8xi1> to vector<1x1x8x8xi1>
    %13 = vector.broadcast %12 : vector<1x1x8x8xi1> to vector<4x1x8x8xi1>
    %14 = vector.broadcast %cst_12 : f32 to vector<4x1x8x8xf32>
    %15 = arith.select %13, %11, %14 : vector<4x1x8x8xi1>, vector<4x1x8x8xf32>
    %16 = vector.shape_cast %15 : vector<4x1x8x8xf32> to vector<4x8x8xf32>
    %cst_13 = arith.constant dense<0xFF800000> : vector<4x8xf32>
    %17 = vector.multi_reduction <maximumf>, %16, %cst_13 [2] : vector<4x8x8xf32> to vector<4x8xf32>
    %18 = vector.shape_cast %17 : vector<4x8xf32> to vector<4x8x1xf32>
    %19 = vector.broadcast %18 : vector<4x8x1xf32> to vector<4x8x8xf32>
    %20 = arith.subf %16, %19 : vector<4x8x8xf32>
    %21 = math.exp %20 : vector<4x8x8xf32>
    %cst_14 = arith.constant dense<0.000000e+00> : vector<4x8xf32>
    %22 = vector.multi_reduction <add>, %21, %cst_14 [2] : vector<4x8x8xf32> to vector<4x8xf32>
    %23 = vector.shape_cast %22 : vector<4x8xf32> to vector<4x8x1xf32>
    %24 = tpu.reciprocal %23 : vector<4x8x1xf32> -> vector<4x8x1xf32>
    %25 = vector.broadcast %24 : vector<4x8x1xf32> to vector<4x8x8xf32>
    %26 = arith.mulf %21, %25 : vector<4x8x8xf32>
    "tpu.trace_start"() <{level = 10 : i32, message = "zqk,zkd->zqd"}> : () -> ()
    %cst_15 = arith.constant dense<0.000000e+00> : vector<4x8x8xf32>
    %27 = tpu.matmul %26, %1, %cst_15 {dimension_numbers = #tpu.dot_dimension_numbers<[2], [1], [1], [2], [0, 0, 0, 1, 1, 2], [0], [0]>} : vector<4x8x8xf32>, vector<4x8x8xf32>, vector<4x8x8xf32> -> vector<4x8x8xf32>
    "tpu.trace_stop"() : () -> ()
    "tpu.trace_start"() <{level = 10 : i32, message = "hmd,hde->hme"}> : () -> ()
    %cst_16 = arith.constant dense<0.000000e+00> : vector<4x8x32xf32>
    %28 = tpu.matmul %27, %8, %cst_16 {dimension_numbers = #tpu.dot_dimension_numbers<[2], [1], [1], [2], [0, 0, 0, 1, 1, 2], [0], [0]>} : vector<4x8x8xf32>, vector<4x8x32xf32>, vector<4x8x32xf32> -> vector<4x8x32xf32>
    "tpu.trace_stop"() : () -> ()
    %cst_17 = arith.constant dense<0.000000e+00> : vector<8x32xf32>
    %29 = vector.multi_reduction <add>, %28, %cst_17 [0] : vector<4x8x32xf32> to vector<8x32xf32>
    %30 = vector.broadcast %9 : vector<1x32xf32> to vector<8x32xf32>
    %31 = arith.addf %29, %30 : vector<8x32xf32>
    %c0_18 = arith.constant 0 : index
    %c0_19 = arith.constant 0 : index
    %c0_20 = arith.constant 0 : index
    %32 = vector.load %arg1[%c0_18, %c0_19, %c0_20] : memref<1x8x32xf32, #tpu.memory_space<vmem>>, vector<1x8x32xf32>
    %33 = vector.shape_cast %32 : vector<1x8x32xf32> to vector<8x32xf32>
    %34 = arith.addf %31, %33 : vector<8x32xf32>
    %c0_21 = arith.constant 0 : index
    %c0_22 = arith.constant 0 : index
    %35 = vector.load %arg9[%c0_21, %c0_22] : memref<1x32xf32, #tpu.memory_space<vmem>>, vector<1x32xf32>
    %c0_23 = arith.constant 0 : index
    %c0_24 = arith.constant 0 : index
    %36 = vector.load %arg10[%c0_23, %c0_24] : memref<1x32xf32, #tpu.memory_space<vmem>>, vector<1x32xf32>
    %cst_25 = arith.constant dense<0.000000e+00> : vector<8xf32>
    %37 = vector.multi_reduction <add>, %34, %cst_25 [1] : vector<8x32xf32> to vector<8xf32>
    %38 = vector.shape_cast %37 : vector<8xf32> to vector<8x1xf32>
    %cst_26 = arith.constant 3.200000e+01 : f32
    %39 = vector.broadcast %cst_26 : f32 to vector<8x1xf32>
    %40 = arith.divf %38, %39 : vector<8x1xf32>
    %41 = vector.broadcast %40 : vector<8x1xf32> to vector<8x32xf32>
    %42 = arith.subf %34, %41 : vector<8x32xf32>
    %43 = arith.mulf %42, %42 : vector<8x32xf32>
    %cst_27 = arith.constant dense<0.000000e+00> : vector<8xf32>
    %44 = vector.multi_reduction <add>, %43, %cst_27 [1] : vector<8x32xf32> to vector<8xf32>
    %45 = vector.shape_cast %44 : vector<8xf32> to vector<8x1xf32>
    %cst_28 = arith.constant 3.200000e+01 : f32
    %46 = vector.broadcast %cst_28 : f32 to vector<8x1xf32>
    %47 = arith.divf %45, %46 : vector<8x1xf32>
    %48 = vector.broadcast %40 : vector<8x1xf32> to vector<8x32xf32>
    %49 = arith.subf %34, %48 : vector<8x32xf32>
    %cst_29 = arith.constant 9.99999974E-6 : f32
    %50 = vector.broadcast %cst_29 : f32 to vector<8x1xf32>
    %51 = arith.addf %47, %50 : vector<8x1xf32>
    %52 = math.rsqrt %51 : vector<8x1xf32>
    %53 = vector.broadcast %52 : vector<8x1xf32> to vector<8x32xf32>
    %54 = arith.mulf %49, %53 : vector<8x32xf32>
    %55 = vector.broadcast %35 : vector<1x32xf32> to vector<8x32xf32>
    %56 = arith.mulf %54, %55 : vector<8x32xf32>
    %57 = vector.broadcast %36 : vector<1x32xf32> to vector<8x32xf32>
    %58 = arith.addf %56, %57 : vector<8x32xf32>
    %59 = vector.shape_cast %58 : vector<8x32xf32> to vector<1x8x32xf32>
    %60 = vector.extract_strided_slice %59 {offsets = [0, 0, 0], sizes = [1, 8, 8], strides = [1, 1, 1]} : vector<1x8x32xf32> to vector<1x8x8xf32>
    %61 = vector.extract_strided_slice %59 {offsets = [0, 0, 8], sizes = [1, 8, 8], strides = [1, 1, 1]} : vector<1x8x32xf32> to vector<1x8x8xf32>
    %62 = vector.extract_strided_slice %59 {offsets = [0, 0, 16], sizes = [1, 8, 8], strides = [1, 1, 1]} : vector<1x8x32xf32> to vector<1x8x8xf32>
    %63 = vector.extract_strided_slice %59 {offsets = [0, 0, 24], sizes = [1, 8, 8], strides = [1, 1, 1]} : vector<1x8x32xf32> to vector<1x8x8xf32>
    %64 = tpu.concatenate %60, %61, %62, %63 in 0 : vector<1x8x8xf32>, vector<1x8x8xf32>, vector<1x8x8xf32>, vector<1x8x8xf32> -> vector<4x8x8xf32>
    %cst_30 = arith.constant 0.176776692 : f32
    %65 = vector.broadcast %cst_30 : f32 to vector<4x8x8xf32>
    %66 = arith.mulf %64, %65 : vector<4x8x8xf32>
    %c0_31 = arith.constant 0 : index
    %c0_32 = arith.constant 0 : index
    %c0_33 = arith.constant 0 : index
    %c0_34 = arith.constant 0 : index
    %67 = vector.load %arg3[%c0_31, %c0_32, %c0_33, %c0_34] : memref<4x1x8x8xf32, #tpu.memory_space<vmem>>, vector<4x1x8x8xf32>
    %68 = vector.shape_cast %67 : vector<4x1x8x8xf32> to vector<4x8x8xf32>
    %c0_35 = arith.constant 0 : index
    %c0_36 = arith.constant 0 : index
    %c0_37 = arith.constant 0 : index
    %c0_38 = arith.constant 0 : index
    %69 = vector.load %arg4[%c0_35, %c0_36, %c0_37, %c0_38] : memref<4x1x8x8xf32, #tpu.memory_space<vmem>>, vector<4x1x8x8xf32>
    %70 = vector.shape_cast %69 : vector<4x1x8x8xf32> to vector<4x8x8xf32>
    %c0_39 = arith.constant 0 : index
    %c0_40 = arith.constant 0 : index
    %c0_41 = arith.constant 0 : index
    %71 = vector.load %arg6[%c0_39, %c0_40, %c0_41] : memref<1x8x8xi8, #tpu.memory_space<vmem>>, vector<1x8x8xi8>
    %c0_i8_42 = arith.constant 0 : i8
    %72 = vector.broadcast %c0_i8_42 : i8 to vector<1x8x8xi8>
    %73 = arith.cmpi ne, %71, %72 : vector<1x8x8xi8>
    %74 = vector.shape_cast %73 : vector<1x8x8xi1> to vector<1x1x8x8xi1>
    %c0_43 = arith.constant 0 : index
    %c0_44 = arith.constant 0 : index
    %c0_45 = arith.constant 0 : index
    %75 = vector.load %arg11[%c0_43, %c0_44, %c0_45] : memref<4x8x32xf32, #tpu.memory_space<vmem>>, vector<4x8x32xf32>
    %c0_46 = arith.constant 0 : index
    %c0_47 = arith.constant 0 : index
    %76 = vector.load %arg12[%c0_46, %c0_47] : memref<1x32xf32, #tpu.memory_space<vmem>>, vector<1x32xf32>
    "tpu.trace_start"() <{level = 10 : i32, message = "zqd,zkd->zqk"}> : () -> ()
    %cst_48 = arith.constant dense<0.000000e+00> : vector<4x8x8xf32>
    %77 = tpu.matmul %66, %68, %cst_48 {dimension_numbers = #tpu.dot_dimension_numbers<[2], [2], [1], [1], [0, 0, 0, 1, 1, 1], [0], [0]>} : vector<4x8x8xf32>, vector<4x8x8xf32>, vector<4x8x8xf32> -> vector<4x8x8xf32>
    "tpu.trace_stop"() : () -> ()
    %78 = vector.shape_cast %77 : vector<4x8x8xf32> to vector<4x1x8x8xf32>
    %cst_49 = arith.constant -1.000000e+20 : f32
    %79 = vector.shape_cast %74 : vector<1x1x8x8xi1> to vector<1x1x8x8xi1>
    %80 = vector.broadcast %79 : vector<1x1x8x8xi1> to vector<4x1x8x8xi1>
    %81 = vector.broadcast %cst_49 : f32 to vector<4x1x8x8xf32>
    %82 = arith.select %80, %78, %81 : vector<4x1x8x8xi1>, vector<4x1x8x8xf32>
    %83 = vector.shape_cast %82 : vector<4x1x8x8xf32> to vector<4x8x8xf32>
    %cst_50 = arith.constant dense<0xFF800000> : vector<4x8xf32>
    %84 = vector.multi_reduction <maximumf>, %83, %cst_50 [2] : vector<4x8x8xf32> to vector<4x8xf32>
    %85 = vector.shape_cast %84 : vector<4x8xf32> to vector<4x8x1xf32>
    %86 = vector.broadcast %85 : vector<4x8x1xf32> to vector<4x8x8xf32>
    %87 = arith.subf %83, %86 : vector<4x8x8xf32>
    %88 = math.exp %87 : vector<4x8x8xf32>
    %cst_51 = arith.constant dense<0.000000e+00> : vector<4x8xf32>
    %89 = vector.multi_reduction <add>, %88, %cst_51 [2] : vector<4x8x8xf32> to vector<4x8xf32>
    %90 = vector.shape_cast %89 : vector<4x8xf32> to vector<4x8x1xf32>
    %91 = tpu.reciprocal %90 : vector<4x8x1xf32> -> vector<4x8x1xf32>
    %92 = vector.broadcast %91 : vector<4x8x1xf32> to vector<4x8x8xf32>
    %93 = arith.mulf %88, %92 : vector<4x8x8xf32>
    "tpu.trace_start"() <{level = 10 : i32, message = "zqk,zkd->zqd"}> : () -> ()
    %cst_52 = arith.constant dense<0.000000e+00> : vector<4x8x8xf32>
    %94 = tpu.matmul %93, %70, %cst_52 {dimension_numbers = #tpu.dot_dimension_numbers<[2], [1], [1], [2], [0, 0, 0, 1, 1, 2], [0], [0]>} : vector<4x8x8xf32>, vector<4x8x8xf32>, vector<4x8x8xf32> -> vector<4x8x8xf32>
    "tpu.trace_stop"() : () -> ()
    "tpu.trace_start"() <{level = 10 : i32, message = "hmd,hde->hme"}> : () -> ()
    %cst_53 = arith.constant dense<0.000000e+00> : vector<4x8x32xf32>
    %95 = tpu.matmul %94, %75, %cst_53 {dimension_numbers = #tpu.dot_dimension_numbers<[2], [1], [1], [2], [0, 0, 0, 1, 1, 2], [0], [0]>} : vector<4x8x8xf32>, vector<4x8x32xf32>, vector<4x8x32xf32> -> vector<4x8x32xf32>
    "tpu.trace_stop"() : () -> ()
    %cst_54 = arith.constant dense<0.000000e+00> : vector<8x32xf32>
    %96 = vector.multi_reduction <add>, %95, %cst_54 [0] : vector<4x8x32xf32> to vector<8x32xf32>
    %97 = vector.broadcast %76 : vector<1x32xf32> to vector<8x32xf32>
    %98 = arith.addf %96, %97 : vector<8x32xf32>
    %99 = arith.addf %58, %98 : vector<8x32xf32>
    %c0_55 = arith.constant 0 : index
    %c0_56 = arith.constant 0 : index
    %100 = vector.load %arg13[%c0_55, %c0_56] : memref<1x32xf32, #tpu.memory_space<vmem>>, vector<1x32xf32>
    %c0_57 = arith.constant 0 : index
    %c0_58 = arith.constant 0 : index
    %101 = vector.load %arg14[%c0_57, %c0_58] : memref<1x32xf32, #tpu.memory_space<vmem>>, vector<1x32xf32>
    %cst_59 = arith.constant dense<0.000000e+00> : vector<8xf32>
    %102 = vector.multi_reduction <add>, %99, %cst_59 [1] : vector<8x32xf32> to vector<8xf32>
    %103 = vector.shape_cast %102 : vector<8xf32> to vector<8x1xf32>
    %cst_60 = arith.constant 3.200000e+01 : f32
    %104 = vector.broadcast %cst_60 : f32 to vector<8x1xf32>
    %105 = arith.divf %103, %104 : vector<8x1xf32>
    %106 = vector.broadcast %105 : vector<8x1xf32> to vector<8x32xf32>
    %107 = arith.subf %99, %106 : vector<8x32xf32>
    %108 = arith.mulf %107, %107 : vector<8x32xf32>
    %cst_61 = arith.constant dense<0.000000e+00> : vector<8xf32>
    %109 = vector.multi_reduction <add>, %108, %cst_61 [1] : vector<8x32xf32> to vector<8xf32>
    %110 = vector.shape_cast %109 : vector<8xf32> to vector<8x1xf32>
    %cst_62 = arith.constant 3.200000e+01 : f32
    %111 = vector.broadcast %cst_62 : f32 to vector<8x1xf32>
    %112 = arith.divf %110, %111 : vector<8x1xf32>
    %113 = vector.broadcast %105 : vector<8x1xf32> to vector<8x32xf32>
    %114 = arith.subf %99, %113 : vector<8x32xf32>
    %cst_63 = arith.constant 9.99999974E-6 : f32
    %115 = vector.broadcast %cst_63 : f32 to vector<8x1xf32>
    %116 = arith.addf %112, %115 : vector<8x1xf32>
    %117 = math.rsqrt %116 : vector<8x1xf32>
    %118 = vector.broadcast %117 : vector<8x1xf32> to vector<8x32xf32>
    %119 = arith.mulf %114, %118 : vector<8x32xf32>
    %120 = vector.broadcast %100 : vector<1x32xf32> to vector<8x32xf32>
    %121 = arith.mulf %119, %120 : vector<8x32xf32>
    %122 = vector.broadcast %101 : vector<1x32xf32> to vector<8x32xf32>
    %123 = arith.addf %121, %122 : vector<8x32xf32>
    %c0_64 = arith.constant 0 : index
    %c0_65 = arith.constant 0 : index
    %124 = vector.load %arg15[%c0_64, %c0_65] : memref<32x128xf32, #tpu.memory_space<vmem>>, vector<32x128xf32>
    %cst_66 = arith.constant dense<0.000000e+00> : vector<8x128xf32>
    %125 = tpu.matmul %123, %124, %cst_66 {dimension_numbers = #tpu.dot_dimension_numbers<[1], [0], [0], [1], [0, 0, 1, 1], [], []>} : vector<8x32xf32>, vector<32x128xf32>, vector<8x128xf32> -> vector<8x128xf32>
    %c0_67 = arith.constant 0 : index
    %c0_68 = arith.constant 0 : index
    %126 = vector.load %arg16[%c0_67, %c0_68] : memref<1x128xf32, #tpu.memory_space<vmem>>, vector<1x128xf32>
    %127 = vector.broadcast %126 : vector<1x128xf32> to vector<8x128xf32>
    %128 = arith.addf %125, %127 : vector<8x128xf32>
    %cst_69 = arith.constant 0.000000e+00 : f32
    %129 = vector.broadcast %cst_69 : f32 to vector<8x128xf32>
    %130 = arith.maximumf %128, %129 : vector<8x128xf32>
    %c0_70 = arith.constant 0 : index
    %c0_71 = arith.constant 0 : index
    %131 = vector.load %arg17[%c0_70, %c0_71] : memref<128x32xf32, #tpu.memory_space<vmem>>, vector<128x32xf32>
    %cst_72 = arith.constant dense<0.000000e+00> : vector<8x32xf32>
    %132 = tpu.matmul %130, %131, %cst_72 {dimension_numbers = #tpu.dot_dimension_numbers<[1], [0], [0], [1], [0, 0, 1, 1], [], []>} : vector<8x128xf32>, vector<128x32xf32>, vector<8x32xf32> -> vector<8x32xf32>
    %c0_73 = arith.constant 0 : index
    %c0_74 = arith.constant 0 : index
    %133 = vector.load %arg18[%c0_73, %c0_74] : memref<1x32xf32, #tpu.memory_space<vmem>>, vector<1x32xf32>
    %134 = vector.broadcast %133 : vector<1x32xf32> to vector<8x32xf32>
    %135 = arith.addf %132, %134 : vector<8x32xf32>
    %136 = arith.addf %123, %135 : vector<8x32xf32>
    %c0_75 = arith.constant 0 : index
    %c0_76 = arith.constant 0 : index
    %137 = vector.load %arg19[%c0_75, %c0_76] : memref<1x32xf32, #tpu.memory_space<vmem>>, vector<1x32xf32>
    %c0_77 = arith.constant 0 : index
    %c0_78 = arith.constant 0 : index
    %138 = vector.load %arg20[%c0_77, %c0_78] : memref<1x32xf32, #tpu.memory_space<vmem>>, vector<1x32xf32>
    %cst_79 = arith.constant dense<0.000000e+00> : vector<8xf32>
    %139 = vector.multi_reduction <add>, %136, %cst_79 [1] : vector<8x32xf32> to vector<8xf32>
    %140 = vector.shape_cast %139 : vector<8xf32> to vector<8x1xf32>
    %cst_80 = arith.constant 3.200000e+01 : f32
    %141 = vector.broadcast %cst_80 : f32 to vector<8x1xf32>
    %142 = arith.divf %140, %141 : vector<8x1xf32>
    %143 = vector.broadcast %142 : vector<8x1xf32> to vector<8x32xf32>
    %144 = arith.subf %136, %143 : vector<8x32xf32>
    %145 = arith.mulf %144, %144 : vector<8x32xf32>
    %cst_81 = arith.constant dense<0.000000e+00> : vector<8xf32>
    %146 = vector.multi_reduction <add>, %145, %cst_81 [1] : vector<8x32xf32> to vector<8xf32>
    %147 = vector.shape_cast %146 : vector<8xf32> to vector<8x1xf32>
    %cst_82 = arith.constant 3.200000e+01 : f32
    %148 = vector.broadcast %cst_82 : f32 to vector<8x1xf32>
    %149 = arith.divf %147, %148 : vector<8x1xf32>
    %150 = vector.broadcast %142 : vector<8x1xf32> to vector<8x32xf32>
    %151 = arith.subf %136, %150 : vector<8x32xf32>
    %cst_83 = arith.constant 9.99999974E-6 : f32
    %152 = vector.broadcast %cst_83 : f32 to vector<8x1xf32>
    %153 = arith.addf %149, %152 : vector<8x1xf32>
    %154 = math.rsqrt %153 : vector<8x1xf32>
    %155 = vector.broadcast %154 : vector<8x1xf32> to vector<8x32xf32>
    %156 = arith.mulf %151, %155 : vector<8x32xf32>
    %157 = vector.broadcast %137 : vector<1x32xf32> to vector<8x32xf32>
    %158 = arith.mulf %156, %157 : vector<8x32xf32>
    %159 = vector.broadcast %138 : vector<1x32xf32> to vector<8x32xf32>
    %160 = arith.addf %158, %159 : vector<8x32xf32>
    %161 = vector.shape_cast %160 : vector<8x32xf32> to vector<1x8x32xf32>
    %c0_84 = arith.constant 0 : index
    %c0_85 = arith.constant 0 : index
    %c0_86 = arith.constant 0 : index
    %162 = vector.load %arg21[%c0_84, %c0_85, %c0_86] : memref<1x8x32xf32, #tpu.memory_space<vmem>>, vector<1x8x32xf32>
    tpu.vector_store %arg21[%c0_84, %c0_85, %c0_86], %161 {strides = array<i32>} : memref<1x8x32xf32, #tpu.memory_space<vmem>>, vector<1x8x32xf32>,
    return
  }
  func.func @transform_0(%arg0: i32) -> (i32, i32, i32) {
    %c0_i32 = arith.constant 0 : i32
    %c0_i32_0 = arith.constant 0 : i32
    %c0_i32_1 = arith.constant 0 : i32
    return %arg0, %c0_i32, %c0_i32_0 : i32, i32, i32
  }
  func.func @transform_1(%arg0: i32) -> (i32, i32, i32, i32) {
    %c0_i32 = arith.constant 0 : i32
    %c0_i32_0 = arith.constant 0 : i32
    %c0_i32_1 = arith.constant 0 : i32
    %c0_i32_2 = arith.constant 0 : i32
    return %c0_i32, %arg0, %c0_i32_0, %c0_i32_1 : i32, i32, i32, i32
  }
  func.func @transform_2(%arg0: i32) -> (i32, i32, i32, i32) {
    %c0_i32 = arith.constant 0 : i32
    %c0_i32_0 = arith.constant 0 : i32
    %c0_i32_1 = arith.constant 0 : i32
    %c0_i32_2 = arith.constant 0 : i32
    return %c0_i32, %arg0, %c0_i32_0, %c0_i32_1 : i32, i32, i32, i32
  }
  func.func @transform_3(%arg0: i32) -> (i32, i32, i32, i32) {
    %c0_i32 = arith.constant 0 : i32
    %c0_i32_0 = arith.constant 0 : i32
    %c0_i32_1 = arith.constant 0 : i32
    %c0_i32_2 = arith.constant 0 : i32
    return %c0_i32, %arg0, %c0_i32_0, %c0_i32_1 : i32, i32, i32, i32
  }
  func.func @transform_4(%arg0: i32) -> (i32, i32, i32) {
    %c0_i32 = arith.constant 0 : i32
    %c0_i32_0 = arith.constant 0 : i32
    %c0_i32_1 = arith.constant 0 : i32
    return %arg0, %c0_i32, %c0_i32_0 : i32, i32, i32
  }
  func.func @transform_5(%arg0: i32) -> (i32, i32, i32) {
    %c0_i32 = arith.constant 0 : i32
    %c0_i32_0 = arith.constant 0 : i32
    %c0_i32_1 = arith.constant 0 : i32
    return %arg0, %c0_i32, %c0_i32_0 : i32, i32, i32
  }
  func.func @transform_6(%arg0: i32) -> (i32, i32, i32) {
    %c0_i32 = arith.constant 0 : i32
    %c0_i32_0 = arith.constant 0 : i32
    %c0_i32_1 = arith.constant 0 : i32
    %c0_i32_2 = arith.constant 0 : i32
    return %c0_i32, %c0_i32_0, %c0_i32_1 : i32, i32, i32
  }
  func.func @transform_7(%arg0: i32) -> (i32, i32) {
    %c0_i32 = arith.constant 0 : i32
    %c0_i32_0 = arith.constant 0 : i32
    %c0_i32_1 = arith.constant 0 : i32
    return %c0_i32, %c0_i32_0 : i32, i32
  }
  func.func @transform_8(%arg0: i32) -> (i32, i32) {
    %c0_i32 = arith.constant 0 : i32
    %c0_i32_0 = arith.constant 0 : i32
    %c0_i32_1 = arith.constant 0 : i32
    return %c0_i32, %c0_i32_0 : i32, i32
  }
  func.func @transform_9(%arg0: i32) -> (i32, i32) {
    %c0_i32 = arith.constant 0 : i32
    %c0_i32_0 = arith.constant 0 : i32
    %c0_i32_1 = arith.constant 0 : i32
    return %c0_i32, %c0_i32_0 : i32, i32
  }
  func.func @transform_10(%arg0: i32) -> (i32, i32, i32) {
    %c0_i32 = arith.constant 0 : i32
    %c0_i32_0 = arith.constant 0 : i32
    %c0_i32_1 = arith.constant 0 : i32
    %c0_i32_2 = arith.constant 0 : i32
    return %c0_i32, %c0_i32_0, %c0_i32_1 : i32, i32, i32
  }
  func.func @transform_11(%arg0: i32) -> (i32, i32) {
    %c0_i32 = arith.constant 0 : i32
    %c0_i32_0 = arith.constant 0 : i32
    %c0_i32_1 = arith.constant 0 : i32
    return %c0_i32, %c0_i32_0 : i32, i32
  }
  func.func @transform_12(%arg0: i32) -> (i32, i32) {
    %c0_i32 = arith.constant 0 : i32
    %c0_i32_0 = arith.constant 0 : i32
    %c0_i32_1 = arith.constant 0 : i32
    return %c0_i32, %c0_i32_0 : i32, i32
  }
  func.func @transform_13(%arg0: i32) -> (i32, i32) {
    %c0_i32 = arith.constant 0 : i32
    %c0_i32_0 = arith.constant 0 : i32
    %c0_i32_1 = arith.constant 0 : i32
    return %c0_i32, %c0_i32_0 : i32, i32
  }
  func.func @transform_14(%arg0: i32) -> (i32, i32) {
    %c0_i32 = arith.constant 0 : i32
    %c0_i32_0 = arith.constant 0 : i32
    %c0_i32_1 = arith.constant 0 : i32
    return %c0_i32, %c0_i32_0 : i32, i32
  }
  func.func @transform_15(%arg0: i32) -> (i32, i32) {
    %c0_i32 = arith.constant 0 : i32
    %c0_i32_0 = arith.constant 0 : i32
    %c0_i32_1 = arith.constant 0 : i32
    return %c0_i32, %c0_i32_0 : i32, i32
  }
  func.func @transform_16(%arg0: i32) -> (i32, i32) {
    %c0_i32 = arith.constant 0 : i32
    %c0_i32_0 = arith.constant 0 : i32
    %c0_i32_1 = arith.constant 0 : i32
    return %c0_i32, %c0_i32_0 : i32, i32
  }
  func.func @transform_17(%arg0: i32) -> (i32, i32) {
    %c0_i32 = arith.constant 0 : i32
    %c0_i32_0 = arith.constant 0 : i32
    %c0_i32_1 = arith.constant 0 : i32
    return %c0_i32, %c0_i32_0 : i32, i32
  }
  func.func @transform_18(%arg0: i32) -> (i32, i32) {
    %c0_i32 = arith.constant 0 : i32
    %c0_i32_0 = arith.constant 0 : i32
    %c0_i32_1 = arith.constant 0 : i32
    return %c0_i32, %c0_i32_0 : i32, i32
  }
  func.func @transform_19(%arg0: i32) -> (i32, i32) {
    %c0_i32 = arith.constant 0 : i32
    %c0_i32_0 = arith.constant 0 : i32
    %c0_i32_1 = arith.constant 0 : i32
    return %c0_i32, %c0_i32_0 : i32, i32
  }
  func.func @transform_20(%arg0: i32) -> (i32, i32, i32) {
    %c0_i32 = arith.constant 0 : i32
    %c0_i32_0 = arith.constant 0 : i32
    %c0_i32_1 = arith.constant 0 : i32
    return %arg0, %c0_i32, %c0_i32_0 : i32, i32, i32
  }
}

</mosaic_0001>

<llo_original>
// kernel: tpu_custom_call.1
$region0: #{tpu_custom_call.1}
  #allocation0 [shape = 'u32[]', space=smem, size = 0x4, offset = 0x4, fixed_abs, tag = 'smem constant byte address 0x4 - core index']
  #allocation1 [shape = 'u32[72,128]{1,0:T(1,128)}', space=vmem, size = 0x9000, scoped, tag = 'internal scratch']
  %s0 = inlined_call_operand.hbm [shape: f32[2,8,32], index: 0, kind: input, shape index: {}]
  %s1 = inlined_call_operand.vmem [shape: f32[4,2,8,8], index: 1, kind: input, shape index: {}]
  %s2 = inlined_call_operand.vmem [shape: f32[4,2,8,8], index: 2, kind: input, shape index: {}]
  %s3 = inlined_call_operand.hbm [shape: f32[4,2,8,8], index: 3, kind: input, shape index: {}]
  %s4 = inlined_call_operand.hbm [shape: s8[2,8,8], index: 4, kind: input, shape index: {}]
  %s5 = inlined_call_operand.hbm [shape: s8[2,8,8], index: 5, kind: input, shape index: {}]
  %s6 = inlined_call_operand.vmem [shape: f32[4,8,32], index: 6, kind: input, shape index: {}]
  %s7 = inlined_call_operand.vmem [shape: f32[1,32], index: 7, kind: input, shape index: {}]
  %s8 = inlined_call_operand.vmem [shape: f32[1,32], index: 8, kind: input, shape index: {}]
  %s9 = inlined_call_operand.vmem [shape: f32[1,32], index: 9, kind: input, shape index: {}]
  %s10 = inlined_call_operand.hbm [shape: f32[4,8,32], index: 10, kind: input, shape index: {}]
  %s11 = inlined_call_operand.vmem [shape: f32[1,32], index: 11, kind: input, shape index: {}]
  %s12 = inlined_call_operand.vmem [shape: f32[1,32], index: 12, kind: input, shape index: {}]
  %s13 = inlined_call_operand.vmem [shape: f32[1,32], index: 13, kind: input, shape index: {}]
  %s14 = inlined_call_operand.hbm [shape: f32[32,128], index: 14, kind: input, shape index: {}]
  %s15 = inlined_call_operand.vmem [shape: f32[1,128], index: 15, kind: input, shape index: {}]
  %s16 = inlined_call_operand.vmem [shape: f32[128,32], index: 16, kind: input, shape index: {}]
  %s17 = inlined_call_operand.vmem [shape: f32[1,32], index: 17, kind: input, shape index: {}]
  %s18 = inlined_call_operand.vmem [shape: f32[1,32], index: 18, kind: input, shape index: {}]
  %s19 = inlined_call_operand.vmem [shape: f32[1,32], index: 19, kind: input, shape index: {}]
  %s20 = inlined_call_operand.hbm [shape: f32[2,8,32], index: 20, kind: output, shape index: {}]
  %s21 = sld [smem:[#allocation0]]
  $region213: #{tpu_custom_call.1} parent=0
    _
  %s23 = ssub.s32 1, %s21
  %s24 = scalar_select 0, %s23, %s21
  $region1: #{tpu_custom_call.1} parent=0
    #allocation2 [shape = 'u8[8192]{0}', space=vmem, size = 0x2000, scoped, tag = 'input window, operand 0']
    #allocation3 [shape = 's32[2]{0}', space=sflag, size = 0x8, scoped, tag = 'scoped memory for tpu_custom_call.1']
    #allocation4 [shape = 's32[2]{0}', space=sflag, size = 0x8, scoped, tag = 'scoped memory for tpu_custom_call.1']
    #allocation5 [shape = 'u8[32768]{0}', space=vmem, size = 0x8000, scoped, tag = 'input window, operand 1']
    #allocation6 [shape = 'u8[32768]{0}', space=vmem, size = 0x8000, scoped, tag = 'input window, operand 2']
    #allocation7 [shape = 'u8[32768]{0}', space=vmem, size = 0x8000, scoped, tag = 'input window, operand 3']
    #allocation8 [shape = 's32[2]{0}', space=sflag, size = 0x8, scoped, tag = 'scoped memory for tpu_custom_call.1']
    #allocation9 [shape = 'u8[2048]{0}', space=vmem, size = 0x800, scoped, tag = 'input window, operand 4']
    #allocation10 [shape = 'u8[2048]{0}', space=vmem, size = 0x800, scoped, tag = 'input window, operand 5']
    #allocation11 [shape = 's32[2]{0}', space=sflag, size = 0x8, scoped, tag = 'scoped memory for tpu_custom_call.1']
    #allocation12 [shape = 'u8[16384]{0}', space=vmem, size = 0x4000, scoped, tag = 'input window, operand 10, single buffered']
    #allocation13 [shape = 'u8[16384]{0}', space=vmem, size = 0x4000, scoped, tag = 'input window, operand 14, single buffered']
    #allocation14 [shape = 's32[1]{0}', space=sflag, size = 0x4, scoped, tag = 'scoped memory for tpu_custom_call.1']
    #allocation15 [shape = 'u8[8192]{0}', space=vmem, size = 0x2000, scoped, tag = 'output window, operand 0']
    %25 = vsyncpa [#allocation3], 0
    %s26 = scalar_lea.sflag [#allocation3], 1
    %27 = vsyncpa %s26, 0
    %28 = vsyncpa [#allocation8], 0
    %s29 = scalar_lea.sflag [#allocation8], 1
    %30 = vsyncpa %s29, 0
    %31 = vsyncpa [#allocation11], 0
    %s32 = scalar_lea.sflag [#allocation11], 1
    %33 = vsyncpa %s32, 0
    %34 = vsyncpa [#allocation14], 0
    %35 = vsyncpa [#allocation4], 0
    %s36 = scalar_lea.sflag [#allocation4], 1
    %37 = vsyncpa %s36, 0
    loop: start=0, step=1, limit=4
    $region2: #{tpu_custom_call.1} parent=1 // loop_pre_header
      _
    $region3: #{tpu_custom_call.1} parent=1 // loop_header
      %s39 = sphi 0, %s43
      %p40 = scmp.ge.s32.totalorder %s39, 4
      %s49 = sphi 0, %s51
      %s52 = sphi 0, %s49
      %s53 = sphi 0, %s52
      %s69 = sphi 0, %s53
      %s75 = sphi 0, %s77
      %s78 = sphi 0, %s75
      %s79 = sphi 0, %s78
      %s95 = sphi 0, %s79
      %s101 = sphi 0, %s103
      %s104 = sphi 0, %s101
      %s105 = sphi 0, %s104
      %s121 = sphi 0, %s105
      %s127 = sphi 0, %s129
      %s130 = sphi 0, %s127
      %s131 = sphi 0, %s130
      %s147 = sphi 0, %s131
      %s153 = sphi 0, %s155
      %s156 = sphi 0, %s153
      %s157 = sphi 0, %s156
      %s173 = sphi 0, %s157
      %s179 = sphi 0, %s181
      %s182 = sphi 0, %s179
      %s183 = sphi 0, %s182
      %s199 = sphi 0, %s183
      %s203 = sphi 0, %s203
      %s205 = sphi 0, %s203
      %s206 = sphi 0, %s205
      %s220 = sphi 0, %s206
      %s224 = sphi 0, %s224
      %s226 = sphi 0, %s224
      %s227 = sphi 0, %s226
      %s241 = sphi 0, %s227
      %s245 = sphi 0, %s245
      %s247 = sphi 0, %s245
      %s248 = sphi 0, %s247
      %s262 = sphi 0, %s248
      %s266 = sphi 0, %s266
      %s268 = sphi 0, %s266
      %s269 = sphi 0, %s268
      %s283 = sphi 0, %s269
      %s287 = sphi 0, %s287
      %s289 = sphi 0, %s287
      %s290 = sphi 0, %s289
      %s304 = sphi 0, %s290
      %s308 = sphi 0, %s308
      %s310 = sphi 0, %s308
      %s311 = sphi 0, %s310
      %s325 = sphi 0, %s311
      %s329 = sphi 0, %s329
      %s331 = sphi 0, %s329
      %s332 = sphi 0, %s331
      %s346 = sphi 0, %s332
      %s350 = sphi 0, %s350
      %s352 = sphi 0, %s350
      %s353 = sphi 0, %s352
      %s367 = sphi 0, %s353
      %s371 = sphi 0, %s371
      %s373 = sphi 0, %s371
      %s374 = sphi 0, %s373
      %s388 = sphi 0, %s374
      %s392 = sphi 0, %s392
      %s394 = sphi 0, %s392
      %s395 = sphi 0, %s394
      %s409 = sphi 0, %s395
      %s413 = sphi 0, %s413
      %s415 = sphi 0, %s413
      %s416 = sphi 0, %s415
      %s430 = sphi 0, %s416
      %s434 = sphi 0, %s434
      %s436 = sphi 0, %s434
      %s437 = sphi 0, %s436
      %s451 = sphi 0, %s437
      %s455 = sphi 0, %s455
      %s457 = sphi 0, %s455
      %s458 = sphi 0, %s457
      %s472 = sphi 0, %s458
      %s476 = sphi 0, %s476
      %s478 = sphi 0, %s476
      %s479 = sphi 0, %s478
      %s493 = sphi 0, %s479
      %s499 = sphi 0, %s501
      %s502 = sphi 0, %s499
      %s503 = sphi 0, %s502
      %s519 = sphi 0, %s503
    $region4: #{tpu_custom_call.1} parent=1 // loop_header_branch
      %42 = sbr.rel (%p40) target = $region8
    $region5: #{tpu_custom_call.1} parent=1 // loop_body
      %s44 = ssub.s32 %s39, 1
      %s45 = ssub.s32 %s39, 2
      %s46 = sadd.s32 %s39, 1
      %s47 = ssub.s32 %s39, %s46
      %p48 = scmp.eq.s32.totalorder %s47, 0
      %s50 = sadd.s32 %s49, 1
      %s51 = scalar_select %p48, %s49, %s50
      %p54 = pneg %p48
      %p55 = scmp.eq.s32.totalorder %s39, 1
      %p56 = por %p54, %p55
      %p57 = scmp.ne.s32.totalorder %s49, %s52
      %p58 = scmp.eq.s32.totalorder %s39, 0
      %p59 = por %p57, %p58
      %p60 = scmp.ne.s32.totalorder %s49, %s52
      %p61 = scmp.eq.s32.totalorder %s44, 1
      %p62 = por %p60, %p61
      %p63 = scmp.ne.s32.totalorder %s52, %s53
      %p64 = scmp.eq.s32.totalorder %s44, 0
      %p65 = por %p63, %p64
      %p66 = scmp.ne.s32.totalorder %s52, %s53
      %p67 = scmp.eq.s32.totalorder %s45, 1
      %p68 = por %p66, %p67
      %p70 = scmp.ne.s32.totalorder %s53, %s69
      %p71 = scmp.eq.s32.totalorder %s45, 0
      %p72 = por %p70, %p71
      %s73 = ssub.s32 %s39, %s46
      %p74 = scmp.eq.s32.totalorder %s73, 0
      %s76 = sadd.s32 %s75, 1
      %s77 = scalar_select %p74, %s75, %s76
      %p80 = pneg %p74
      %p81 = scmp.eq.s32.totalorder %s39, 1
      %p82 = por %p80, %p81
      %p83 = scmp.ne.s32.totalorder %s75, %s78
      %p84 = scmp.eq.s32.totalorder %s39, 0
      %p85 = por %p83, %p84
      %p86 = scmp.ne.s32.totalorder %s75, %s78
      %p87 = scmp.eq.s32.totalorder %s44, 1
      %p88 = por %p86, %p87
      %p89 = scmp.ne.s32.totalorder %s78, %s79
      %p90 = scmp.eq.s32.totalorder %s44, 0
      %p91 = por %p89, %p90
      %p92 = scmp.ne.s32.totalorder %s78, %s79
      %p93 = scmp.eq.s32.totalorder %s45, 1
      %p94 = por %p92, %p93
      %p96 = scmp.ne.s32.totalorder %s79, %s95
      %p97 = scmp.eq.s32.totalorder %s45, 0
      %p98 = por %p96, %p97
      %s99 = ssub.s32 %s39, %s46
      %p100 = scmp.eq.s32.totalorder %s99, 0
      %s102 = sadd.s32 %s101, 1
      %s103 = scalar_select %p100, %s101, %s102
      %p106 = pneg %p100
      %p107 = scmp.eq.s32.totalorder %s39, 1
      %p108 = por %p106, %p107
      %p109 = scmp.ne.s32.totalorder %s101, %s104
      %p110 = scmp.eq.s32.totalorder %s39, 0
      %p111 = por %p109, %p110
      %p112 = scmp.ne.s32.totalorder %s101, %s104
      %p113 = scmp.eq.s32.totalorder %s44, 1
      %p114 = por %p112, %p113
      %p115 = scmp.ne.s32.totalorder %s104, %s105
      %p116 = scmp.eq.s32.totalorder %s44, 0
      %p117 = por %p115, %p116
      %p118 = scmp.ne.s32.totalorder %s104, %s105
      %p119 = scmp.eq.s32.totalorder %s45, 1
      %p120 = por %p118, %p119
      %p122 = scmp.ne.s32.totalorder %s105, %s121
      %p123 = scmp.eq.s32.totalorder %s45, 0
      %p124 = por %p122, %p123
      %s125 = ssub.s32 %s39, %s46
      %p126 = scmp.eq.s32.totalorder %s125, 0
      %s128 = sadd.s32 %s127, 1
      %s129 = scalar_select %p126, %s127, %s128
      %p132 = pneg %p126
      %p133 = scmp.eq.s32.totalorder %s39, 1
      %p134 = por %p132, %p133
      %p135 = scmp.ne.s32.totalorder %s127, %s130
      %p136 = scmp.eq.s32.totalorder %s39, 0
      %p137 = por %p135, %p136
      %p138 = scmp.ne.s32.totalorder %s127, %s130
      %p139 = scmp.eq.s32.totalorder %s44, 1
      %p140 = por %p138, %p139
      %p141 = scmp.ne.s32.totalorder %s130, %s131
      %p142 = scmp.eq.s32.totalorder %s44, 0
      %p143 = por %p141, %p142
      %p144 = scmp.ne.s32.totalorder %s130, %s131
      %p145 = scmp.eq.s32.totalorder %s45, 1
      %p146 = por %p144, %p145
      %p148 = scmp.ne.s32.totalorder %s131, %s147
      %p149 = scmp.eq.s32.totalorder %s45, 0
      %p150 = por %p148, %p149
      %s151 = ssub.s32 %s39, %s46
      %p152 = scmp.eq.s32.totalorder %s151, 0
      %s154 = sadd.s32 %s153, 1
      %s155 = scalar_select %p152, %s153, %s154
      %p158 = pneg %p152
      %p159 = scmp.eq.s32.totalorder %s39, 1
      %p160 = por %p158, %p159
      %p161 = scmp.ne.s32.totalorder %s153, %s156
      %p162 = scmp.eq.s32.totalorder %s39, 0
      %p163 = por %p161, %p162
      %p164 = scmp.ne.s32.totalorder %s153, %s156
      %p165 = scmp.eq.s32.totalorder %s44, 1
      %p166 = por %p164, %p165
      %p167 = scmp.ne.s32.totalorder %s156, %s157
      %p168 = scmp.eq.s32.totalorder %s44, 0
      %p169 = por %p167, %p168
      %p170 = scmp.ne.s32.totalorder %s156, %s157
      %p171 = scmp.eq.s32.totalorder %s45, 1
      %p172 = por %p170, %p171
      %p174 = scmp.ne.s32.totalorder %s157, %s173
      %p175 = scmp.eq.s32.totalorder %s45, 0
      %p176 = por %p174, %p175
      %s177 = ssub.s32 %s39, %s46
      %p178 = scmp.eq.s32.totalorder %s177, 0
      %s180 = sadd.s32 %s179, 1
      %s181 = scalar_select %p178, %s179, %s180
      %p184 = pneg %p178
      %p185 = scmp.eq.s32.totalorder %s39, 1
      %p186 = por %p184, %p185
      %p187 = scmp.ne.s32.totalorder %s179, %s182
      %p188 = scmp.eq.s32.totalorder %s39, 0
      %p189 = por %p187, %p188
      %p190 = scmp.ne.s32.totalorder %s179, %s182
      %p191 = scmp.eq.s32.totalorder %s44, 1
      %p192 = por %p190, %p191
      %p193 = scmp.ne.s32.totalorder %s182, %s183
      %p194 = scmp.eq.s32.totalorder %s44, 0
      %p195 = por %p193, %p194
      %p196 = scmp.ne.s32.totalorder %s182, %s183
      %p197 = scmp.eq.s32.totalorder %s45, 1
      %p198 = por %p196, %p197
      %p200 = scmp.ne.s32.totalorder %s183, %s199
      %p201 = scmp.eq.s32.totalorder %s45, 0
      %p202 = por %p200, %p201
      %s204 = sadd.s32 %s203, 1
      %p207 = scmp.eq.s32.totalorder %s39, 1
      %p208 = scmp.ne.s32.totalorder %s203, %s205
      %p209 = scmp.eq.s32.totalorder %s39, 0
      %p210 = por %p208, %p209
      %p211 = scmp.ne.s32.totalorder %s203, %s205
      %p212 = scmp.eq.s32.totalorder %s44, 1
      %p213 = por %p211, %p212
      %p214 = scmp.ne.s32.totalorder %s205, %s206
      %p215 = scmp.eq.s32.totalorder %s44, 0
      %p216 = por %p214, %p215
      %p217 = scmp.ne.s32.totalorder %s205, %s206
      %p218 = scmp.eq.s32.totalorder %s45, 1
      %p219 = por %p217, %p218
      %p221 = scmp.ne.s32.totalorder %s206, %s220
      %p222 = scmp.eq.s32.totalorder %s45, 0
      %p223 = por %p221, %p222
      %s225 = sadd.s32 %s224, 1
      %p228 = scmp.eq.s32.totalorder %s39, 1
      %p229 = scmp.ne.s32.totalorder %s224, %s226
      %p230 = scmp.eq.s32.totalorder %s39, 0
      %p231 = por %p229, %p230
      %p232 = scmp.ne.s32.totalorder %s224, %s226
      %p233 = scmp.eq.s32.totalorder %s44, 1
      %p234 = por %p232, %p233
      %p235 = scmp.ne.s32.totalorder %s226, %s227
      %p236 = scmp.eq.s32.totalorder %s44, 0
      %p237 = por %p235, %p236
      %p238 = scmp.ne.s32.totalorder %s226, %s227
      %p239 = scmp.eq.s32.totalorder %s45, 1
      %p240 = por %p238, %p239
      %p242 = scmp.ne.s32.totalorder %s227, %s241
      %p243 = scmp.eq.s32.totalorder %s45, 0
      %p244 = por %p242, %p243
      %s246 = sadd.s32 %s245, 1
      %p249 = scmp.eq.s32.totalorder %s39, 1
      %p250 = scmp.ne.s32.totalorder %s245, %s247
      %p251 = scmp.eq.s32.totalorder %s39, 0
      %p252 = por %p250, %p251
      %p253 = scmp.ne.s32.totalorder %s245, %s247
      %p254 = scmp.eq.s32.totalorder %s44, 1
      %p255 = por %p253, %p254
      %p256 = scmp.ne.s32.totalorder %s247, %s248
      %p257 = scmp.eq.s32.totalorder %s44, 0
      %p258 = por %p256, %p257
      %p259 = scmp.ne.s32.totalorder %s247, %s248
      %p260 = scmp.eq.s32.totalorder %s45, 1
      %p261 = por %p259, %p260
      %p263 = scmp.ne.s32.totalorder %s248, %s262
      %p264 = scmp.eq.s32.totalorder %s45, 0
      %p265 = por %p263, %p264
      %s267 = sadd.s32 %s266, 1
      %p270 = scmp.eq.s32.totalorder %s39, 1
      %p271 = scmp.ne.s32.totalorder %s266, %s268
      %p272 = scmp.eq.s32.totalorder %s39, 0
      %p273 = por %p271, %p272
      %p274 = scmp.ne.s32.totalorder %s266, %s268
      %p275 = scmp.eq.s32.totalorder %s44, 1
      %p276 = por %p274, %p275
      %p277 = scmp.ne.s32.totalorder %s268, %s269
      %p278 = scmp.eq.s32.totalorder %s44, 0
      %p279 = por %p277, %p278
      %p280 = scmp.ne.s32.totalorder %s268, %s269
      %p281 = scmp.eq.s32.totalorder %s45, 1
      %p282 = por %p280, %p281
      %p284 = scmp.ne.s32.totalorder %s269, %s283
      %p285 = scmp.eq.s32.totalorder %s45, 0
      %p286 = por %p284, %p285
      %s288 = sadd.s32 %s287, 1
      %p291 = scmp.eq.s32.totalorder %s39, 1
      %p292 = scmp.ne.s32.totalorder %s287, %s289
      %p293 = scmp.eq.s32.totalorder %s39, 0
      %p294 = por %p292, %p293
      %p295 = scmp.ne.s32.totalorder %s287, %s289
      %p296 = scmp.eq.s32.totalorder %s44, 1
      %p297 = por %p295, %p296
      %p298 = scmp.ne.s32.totalorder %s289, %s290
      %p299 = scmp.eq.s32.totalorder %s44, 0
      %p300 = por %p298, %p299
      %p301 = scmp.ne.s32.totalorder %s289, %s290
      %p302 = scmp.eq.s32.totalorder %s45, 1
      %p303 = por %p301, %p302
      %p305 = scmp.ne.s32.totalorder %s290, %s304
      %p306 = scmp.eq.s32.totalorder %s45, 0
      %p307 = por %p305, %p306
      %s309 = sadd.s32 %s308, 1
      %p312 = scmp.eq.s32.totalorder %s39, 1
      %p313 = scmp.ne.s32.totalorder %s308, %s310
      %p314 = scmp.eq.s32.totalorder %s39, 0
      %p315 = por %p313, %p314
      %p316 = scmp.ne.s32.totalorder %s308, %s310
      %p317 = scmp.eq.s32.totalorder %s44, 1
      %p318 = por %p316, %p317
      %p319 = scmp.ne.s32.totalorder %s310, %s311
      %p320 = scmp.eq.s32.totalorder %s44, 0
      %p321 = por %p319, %p320
      %p322 = scmp.ne.s32.totalorder %s310, %s311
      %p323 = scmp.eq.s32.totalorder %s45, 1
      %p324 = por %p322, %p323
      %p326 = scmp.ne.s32.totalorder %s311, %s325
      %p327 = scmp.eq.s32.totalorder %s45, 0
      %p328 = por %p326, %p327
      %s330 = sadd.s32 %s329, 1
      %p333 = scmp.eq.s32.totalorder %s39, 1
      %p334 = scmp.ne.s32.totalorder %s329, %s331
      %p335 = scmp.eq.s32.totalorder %s39, 0
      %p336 = por %p334, %p335
      %p337 = scmp.ne.s32.totalorder %s329, %s331
      %p338 = scmp.eq.s32.totalorder %s44, 1
      %p339 = por %p337, %p338
      %p340 = scmp.ne.s32.totalorder %s331, %s332
      %p341 = scmp.eq.s32.totalorder %s44, 0
      %p342 = por %p340, %p341
      %p343 = scmp.ne.s32.totalorder %s331, %s332
      %p344 = scmp.eq.s32.totalorder %s45, 1
      %p345 = por %p343, %p344
      %p347 = scmp.ne.s32.totalorder %s332, %s346
      %p348 = scmp.eq.s32.totalorder %s45, 0
      %p349 = por %p347, %p348
      %s351 = sadd.s32 %s350, 1
      %p354 = scmp.eq.s32.totalorder %s39, 1
      %p355 = scmp.ne.s32.totalorder %s350, %s352
      %p356 = scmp.eq.s32.totalorder %s39, 0
      %p357 = por %p355, %p356
      %p358 = scmp.ne.s32.totalorder %s350, %s352
      %p359 = scmp.eq.s32.totalorder %s44, 1
      %p360 = por %p358, %p359
      %p361 = scmp.ne.s32.totalorder %s352, %s353
      %p362 = scmp.eq.s32.totalorder %s44, 0
      %p363 = por %p361, %p362
      %p364 = scmp.ne.s32.totalorder %s352, %s353
      %p365 = scmp.eq.s32.totalorder %s45, 1
      %p366 = por %p364, %p365
      %p368 = scmp.ne.s32.totalorder %s353, %s367
      %p369 = scmp.eq.s32.totalorder %s45, 0
      %p370 = por %p368, %p369
      %s372 = sadd.s32 %s371, 1
      %p375 = scmp.eq.s32.totalorder %s39, 1
      %p376 = scmp.ne.s32.totalorder %s371, %s373
      %p377 = scmp.eq.s32.totalorder %s39, 0
      %p378 = por %p376, %p377
      %p379 = scmp.ne.s32.totalorder %s371, %s373
      %p380 = scmp.eq.s32.totalorder %s44, 1
      %p381 = por %p379, %p380
      %p382 = scmp.ne.s32.totalorder %s373, %s374
      %p383 = scmp.eq.s32.totalorder %s44, 0
      %p384 = por %p382, %p383
      %p385 = scmp.ne.s32.totalorder %s373, %s374
      %p386 = scmp.eq.s32.totalorder %s45, 1
      %p387 = por %p385, %p386
      %p389 = scmp.ne.s32.totalorder %s374, %s388
      %p390 = scmp.eq.s32.totalorder %s45, 0
      %p391 = por %p389, %p390
      %s393 = sadd.s32 %s392, 1
      %p396 = scmp.eq.s32.totalorder %s39, 1
      %p397 = scmp.ne.s32.totalorder %s392, %s394
      %p398 = scmp.eq.s32.totalorder %s39, 0
      %p399 = por %p397, %p398
      %p400 = scmp.ne.s32.totalorder %s392, %s394
      %p401 = scmp.eq.s32.totalorder %s44, 1
      %p402 = por %p400, %p401
      %p403 = scmp.ne.s32.totalorder %s394, %s395
      %p404 = scmp.eq.s32.totalorder %s44, 0
      %p405 = por %p403, %p404
      %p406 = scmp.ne.s32.totalorder %s394, %s395
      %p407 = scmp.eq.s32.totalorder %s45, 1
      %p408 = por %p406, %p407
      %p410 = scmp.ne.s32.totalorder %s395, %s409
      %p411 = scmp.eq.s32.totalorder %s45, 0
      %p412 = por %p410, %p411
      %s414 = sadd.s32 %s413, 1
      %p417 = scmp.eq.s32.totalorder %s39, 1
      %p418 = scmp.ne.s32.totalorder %s413, %s415
      %p419 = scmp.eq.s32.totalorder %s39, 0
      %p420 = por %p418, %p419
      %p421 = scmp.ne.s32.totalorder %s413, %s415
      %p422 = scmp.eq.s32.totalorder %s44, 1
      %p423 = por %p421, %p422
      %p424 = scmp.ne.s32.totalorder %s415, %s416
      %p425 = scmp.eq.s32.totalorder %s44, 0
      %p426 = por %p424, %p425
      %p427 = scmp.ne.s32.totalorder %s415, %s416
      %p428 = scmp.eq.s32.totalorder %s45, 1
      %p429 = por %p427, %p428
      %p431 = scmp.ne.s32.totalorder %s416, %s430
      %p432 = scmp.eq.s32.totalorder %s45, 0
      %p433 = por %p431, %p432
      %s435 = sadd.s32 %s434, 1
      %p438 = scmp.eq.s32.totalorder %s39, 1
      %p439 = scmp.ne.s32.totalorder %s434, %s436
      %p440 = scmp.eq.s32.totalorder %s39, 0
      %p441 = por %p439, %p440
      %p442 = scmp.ne.s32.totalorder %s434, %s436
      %p443 = scmp.eq.s32.totalorder %s44, 1
      %p444 = por %p442, %p443
      %p445 = scmp.ne.s32.totalorder %s436, %s437
      %p446 = scmp.eq.s32.totalorder %s44, 0
      %p447 = por %p445, %p446
      %p448 = scmp.ne.s32.totalorder %s436, %s437
      %p449 = scmp.eq.s32.totalorder %s45, 1
      %p450 = por %p448, %p449
      %p452 = scmp.ne.s32.totalorder %s437, %s451
      %p453 = scmp.eq.s32.totalorder %s45, 0
      %p454 = por %p452, %p453
      %s456 = sadd.s32 %s455, 1
      %p459 = scmp.eq.s32.totalorder %s39, 1
      %p460 = scmp.ne.s32.totalorder %s455, %s457
      %p461 = scmp.eq.s32.totalorder %s39, 0
      %p462 = por %p460, %p461
      %p463 = scmp.ne.s32.totalorder %s455, %s457
      %p464 = scmp.eq.s32.totalorder %s44, 1
      %p465 = por %p463, %p464
      %p466 = scmp.ne.s32.totalorder %s457, %s458
      %p467 = scmp.eq.s32.totalorder %s44, 0
      %p468 = por %p466, %p467
      %p469 = scmp.ne.s32.totalorder %s457, %s458
      %p470 = scmp.eq.s32.totalorder %s45, 1
      %p471 = por %p469, %p470
      %p473 = scmp.ne.s32.totalorder %s458, %s472
      %p474 = scmp.eq.s32.totalorder %s45, 0
      %p475 = por %p473, %p474
      %s477 = sadd.s32 %s476, 1
      %p480 = scmp.eq.s32.totalorder %s39, 1
      %p481 = scmp.ne.s32.totalorder %s476, %s478
      %p482 = scmp.eq.s32.totalorder %s39, 0
      %p483 = por %p481, %p482
      %p484 = scmp.ne.s32.totalorder %s476, %s478
      %p485 = scmp.eq.s32.totalorder %s44, 1
      %p486 = por %p484, %p485
      %p487 = scmp.ne.s32.totalorder %s478, %s479
      %p488 = scmp.eq.s32.totalorder %s44, 0
      %p489 = por %p487, %p488
      %p490 = scmp.ne.s32.totalorder %s478, %s479
      %p491 = scmp.eq.s32.totalorder %s45, 1
      %p492 = por %p490, %p491
      %p494 = scmp.ne.s32.totalorder %s479, %s493
      %p495 = scmp.eq.s32.totalorder %s45, 0
      %p496 = por %p494, %p495
      %s497 = ssub.s32 %s39, %s46
      %p498 = scmp.eq.s32.totalorder %s497, 0
      %s500 = sadd.s32 %s499, 1
      %s501 = scalar_select %p498, %s499, %s500
      %p504 = pneg %p498
      %p505 = scmp.eq.s32.totalorder %s39, 1
      %p506 = por %p504, %p505
      %p507 = scmp.ne.s32.totalorder %s499, %s502
      %p508 = scmp.eq.s32.totalorder %s39, 0
      %p509 = por %p507, %p508
      %p510 = scmp.ne.s32.totalorder %s499, %s502
      %p511 = scmp.eq.s32.totalorder %s44, 1
      %p512 = por %p510, %p511
      %p513 = scmp.ne.s32.totalorder %s502, %s503
      %p514 = scmp.eq.s32.totalorder %s44, 0
      %p515 = por %p513, %p514
      %p516 = scmp.ne.s32.totalorder %s502, %s503
      %p517 = scmp.eq.s32.totalorder %s45, 1
      %p518 = por %p516, %p517
      %p520 = scmp.ne.s32.totalorder %s503, %s519
      %p521 = scmp.eq.s32.totalorder %s45, 0
      %p522 = por %p520, %p521
      %p523 = scmp.le.s32.totalorder 1, %s39
      %p524 = scmp.lt.s32.totalorder %s39, 3
      %p525 = pnand %p523, %p524
      %p526 = pneg %p525
      // Predicated region
      $region9: #{tpu_custom_call.1} parent=5 // pred_check
        _
      $region10: #{tpu_custom_call.1} parent=5 // pred_check_branch
        %528 = sbr.rel (%p525) target = $region12
      $region11: #{tpu_custom_call.1} parent=5 // pred_region
        %s529 = ssub.s32 %s39, 1
        // Predicated region
        $region13: #{tpu_custom_call.1} parent=11 // pred_check
          %p530 = pneg %p216
        $region14: #{tpu_custom_call.1} parent=11 // pred_check_branch
          %532 = sbr.rel (%p530) target = $region16
        $region15: #{tpu_custom_call.1} parent=11 // pred_region
          _
        $region16: #{tpu_custom_call.1} parent=11 // pred_fallthru
          _
        // Predicated region
        $region17: #{tpu_custom_call.1} parent=11 // pred_check
          %p533 = pneg %p237
        $region18: #{tpu_custom_call.1} parent=11 // pred_check_branch
          %535 = sbr.rel (%p533) target = $region20
        $region19: #{tpu_custom_call.1} parent=11 // pred_region
          _
        $region20: #{tpu_custom_call.1} parent=11 // pred_fallthru
          _
        // Predicated region
        $region21: #{tpu_custom_call.1} parent=11 // pred_check
          %p536 = pneg %p258
        $region22: #{tpu_custom_call.1} parent=11 // pred_check_branch
          %538 = sbr.rel (%p536) target = $region24
        $region23: #{tpu_custom_call.1} parent=11 // pred_region
          _
        $region24: #{tpu_custom_call.1} parent=11 // pred_fallthru
          _
        // Predicated region
        $region25: #{tpu_custom_call.1} parent=11 // pred_check
          %p539 = pneg %p279
        $region26: #{tpu_custom_call.1} parent=11 // pred_check_branch
          %541 = sbr.rel (%p539) target = $region28
        $region27: #{tpu_custom_call.1} parent=11 // pred_region
          _
        $region28: #{tpu_custom_call.1} parent=11 // pred_fallthru
          _
        // Predicated region
        $region29: #{tpu_custom_call.1} parent=11 // pred_check
          %p542 = pneg %p300
        $region30: #{tpu_custom_call.1} parent=11 // pred_check_branch
          %544 = sbr.rel (%p542) target = $region32
        $region31: #{tpu_custom_call.1} parent=11 // pred_region
          %546 = vsyncadd [#allocation11], 0
          %s547 = sshll.u32 %s10, 4
          %s548 = int_to_ptr.hbm [resolvable:$true] %s547
          %s549 = sshll.u32 [#allocation12], 4
          %s550 = int_to_ptr.vmem [resolvable:$true] %s549
          %555 = dma.hbm_to_vmem [thread:$0]  %s548, 512, %s550, [#allocation11], 128, 128, 8
        $region32: #{tpu_custom_call.1} parent=11 // pred_fallthru
          _
        // Predicated region
        $region33: #{tpu_custom_call.1} parent=11 // pred_check
          %p556 = pneg %p321
        $region34: #{tpu_custom_call.1} parent=11 // pred_check_branch
          %558 = sbr.rel (%p556) target = $region36
        $region35: #{tpu_custom_call.1} parent=11 // pred_region
          _
        $region36: #{tpu_custom_call.1} parent=11 // pred_fallthru
          _
        // Predicated region
        $region37: #{tpu_custom_call.1} parent=11 // pred_check
          %p559 = pneg %p342
        $region38: #{tpu_custom_call.1} parent=11 // pred_check_branch
          %561 = sbr.rel (%p559) target = $region40
        $region39: #{tpu_custom_call.1} parent=11 // pred_region
          _
        $region40: #{tpu_custom_call.1} parent=11 // pred_fallthru
          _
        // Predicated region
        $region41: #{tpu_custom_call.1} parent=11 // pred_check
          %p562 = pneg %p363
        $region42: #{tpu_custom_call.1} parent=11 // pred_check_branch
          %564 = sbr.rel (%p562) target = $region44
        $region43: #{tpu_custom_call.1} parent=11 // pred_region
          _
        $region44: #{tpu_custom_call.1} parent=11 // pred_fallthru
          _
        // Predicated region
        $region45: #{tpu_custom_call.1} parent=11 // pred_check
          %p565 = pneg %p384
        $region46: #{tpu_custom_call.1} parent=11 // pred_check_branch
          %567 = sbr.rel (%p565) target = $region48
        $region47: #{tpu_custom_call.1} parent=11 // pred_region
          %569 = vsyncadd [#allocation14], 0
          %s570 = sshll.u32 %s14, 4
          %s571 = int_to_ptr.hbm [resolvable:$true] %s570
          %s572 = sshll.u32 [#allocation13], 4
          %s573 = int_to_ptr.vmem [resolvable:$true] %s572
          %578 = dma.hbm_to_vmem [thread:$0]  %s571, 512, %s573, [#allocation14], 128, 128, 8
        $region48: #{tpu_custom_call.1} parent=11 // pred_fallthru
          _
        // Predicated region
        $region49: #{tpu_custom_call.1} parent=11 // pred_check
          %p579 = pneg %p405
        $region50: #{tpu_custom_call.1} parent=11 // pred_check_branch
          %581 = sbr.rel (%p579) target = $region52
        $region51: #{tpu_custom_call.1} parent=11 // pred_region
          _
        $region52: #{tpu_custom_call.1} parent=11 // pred_fallthru
          _
        // Predicated region
        $region53: #{tpu_custom_call.1} parent=11 // pred_check
          %p582 = pneg %p426
        $region54: #{tpu_custom_call.1} parent=11 // pred_check_branch
          %584 = sbr.rel (%p582) target = $region56
        $region55: #{tpu_custom_call.1} parent=11 // pred_region
          _
        $region56: #{tpu_custom_call.1} parent=11 // pred_fallthru
          _
        // Predicated region
        $region57: #{tpu_custom_call.1} parent=11 // pred_check
          %p585 = pneg %p447
        $region58: #{tpu_custom_call.1} parent=11 // pred_check_branch
          %587 = sbr.rel (%p585) target = $region60
        $region59: #{tpu_custom_call.1} parent=11 // pred_region
          _
        $region60: #{tpu_custom_call.1} parent=11 // pred_fallthru
          _
        // Predicated region
        $region61: #{tpu_custom_call.1} parent=11 // pred_check
          %p588 = pneg %p468
        $region62: #{tpu_custom_call.1} parent=11 // pred_check_branch
          %590 = sbr.rel (%p588) target = $region64
        $region63: #{tpu_custom_call.1} parent=11 // pred_region
          _
        $region64: #{tpu_custom_call.1} parent=11 // pred_fallthru
          _
        // Predicated region
        $region65: #{tpu_custom_call.1} parent=11 // pred_check
          %p591 = pneg %p489
        $region66: #{tpu_custom_call.1} parent=11 // pred_check_branch
          %593 = sbr.rel (%p591) target = $region68
        $region67: #{tpu_custom_call.1} parent=11 // pred_region
          _
        $region68: #{tpu_custom_call.1} parent=11 // pred_fallthru
          _
      $region12: #{tpu_custom_call.1} parent=5 // pred_fallthru
        _
      %p594 = scmp.lt.s32.totalorder %s39, 2
      // Predicated region
      $region69: #{tpu_custom_call.1} parent=5 // pred_check
        %p595 = pneg %p594
      $region70: #{tpu_custom_call.1} parent=5 // pred_check_branch
        %597 = sbr.rel (%p595) target = $region72
      $region71: #{tpu_custom_call.1} parent=5 // pred_region
        // Predicated region
        $region73: #{tpu_custom_call.1} parent=71 // pred_check
          %p598 = pneg %p59
        $region74: #{tpu_custom_call.1} parent=71 // pred_check_branch
          %600 = sbr.rel (%p598) target = $region76
        $region75: #{tpu_custom_call.1} parent=71 // pred_region
          %s601 = sand.u32 %s49, 1
          %s602 = scalar_lea.sflag [#allocation3], %s601
          %s603 = sand.u32 %s49, 1
          %s604 = smul.addr %s603, 8
          %s605 = scalar_lea.vmem [#allocation2], %s604
          %607 = vsyncadd %s602, 0
          %s608 = smul.addr %s39, 8
          %s609 = scalar_lea.hbm %s0, %s608
          %s611 = sshll.u32 %s609, 4
          %s612 = int_to_ptr.hbm [resolvable:$true] %s611
          %s613 = sshll.u32 %s605, 4
          %s614 = int_to_ptr.vmem [resolvable:$true] %s613
          %616 = dma.hbm_to_vmem [thread:$0]  %s612, 128, %s614, %s602
        $region76: #{tpu_custom_call.1} parent=71 // pred_fallthru
          _
        // Predicated region
        $region77: #{tpu_custom_call.1} parent=71 // pred_check
          %p617 = pneg %p85
        $region78: #{tpu_custom_call.1} parent=71 // pred_check_branch
          %619 = sbr.rel (%p617) target = $region80
        $region79: #{tpu_custom_call.1} parent=71 // pred_region
          %s620 = sand.u32 %s75, 1
          %s621 = sand.u32 %s75, 1
          %s622 = smul.addr %s621, 32
          %s623 = scalar_lea.vmem [#allocation5], %s622
          %s624 = smul.addr %s39, 8
          %s625 = scalar_lea.vmem %s1, %s624
          // Predicated region
          $region81: #{tpu_custom_call.1} parent=79 // pred_check
            _
          $region82: #{tpu_custom_call.1} parent=79 // pred_check_branch
            %627 = sbr.rel (0) target = $region84
          $region83: #{tpu_custom_call.1} parent=79 // pred_region
            // Predicated region
            $region85: #{tpu_custom_call.1} parent=83 // pred_check
              _
            $region86: #{tpu_custom_call.1} parent=83 // pred_check_branch
              %629 = sbr.rel (0) target = $region88
            $region87: #{tpu_custom_call.1} parent=83 // pred_region
              // Predicated region
              $region100: #{tpu_custom_call.1} parent=87 // pred_check
                _
              $region101: #{tpu_custom_call.1} parent=87 // pred_check_branch
                %651 = sbr.rel (0) target = $region103
              $region102: #{tpu_custom_call.1} parent=87 // pred_region
                loop: start=0, step=1, limit=1
                $region104: #{tpu_custom_call.1} parent=102 // loop_pre_header
                  _
                $region105: #{tpu_custom_call.1} parent=102 // loop_header
                  %s653 = sphi 0, %s657
                  %p654 = scmp.ge.s32.totalorder %s653, 1
                  %s658 = sphi %s625, %s625
                  %s659 = sphi %s623, %s623
                $region106: #{tpu_custom_call.1} parent=102 // loop_header_branch
                  %656 = sbr.rel (%p654) target = $region110
                $region107: #{tpu_custom_call.1} parent=102 // loop_body
                  %v660 = vld [vmem:[%s658] sm:$0xff]
                  %661 = vst [vmem:[%s659] sm:$0xff] %v660
                  %v662 = vld [vmem:[%s658 + $0x10] sm:$0xff]
                  %663 = vst [vmem:[%s659 + $0x8] sm:$0xff] %v662
                  %v664 = vld [vmem:[%s658 + $0x20] sm:$0xff]
                  %665 = vst [vmem:[%s659 + $0x10] sm:$0xff] %v664
                  %v666 = vld [vmem:[%s658 + $0x30] sm:$0xff]
                  %667 = vst [vmem:[%s659 + $0x18] sm:$0xff] %v666
                $region108: #{tpu_custom_call.1} parent=102 // loop_footer
                  %s657 = sadd.s32 1, %s653
                $region109: #{tpu_custom_call.1} parent=102 // loop_footer_branch
                  %652 = sbr.rel target = $region105
                $region110: #{tpu_custom_call.1} parent=102 // loop_exit
                  _
              $region103: #{tpu_custom_call.1} parent=87 // pred_fallthru
                _
              // Predicated region
              $region111: #{tpu_custom_call.1} parent=87 // pred_check
                _
              $region112: #{tpu_custom_call.1} parent=87 // pred_check_branch
                %669 = sbr.rel target = $region114
              $region113: #{tpu_custom_call.1} parent=87 // pred_region
                _
              $region114: #{tpu_custom_call.1} parent=87 // pred_fallthru
                _
            $region88: #{tpu_custom_call.1} parent=83 // pred_fallthru
              _
            // Predicated region
            $region89: #{tpu_custom_call.1} parent=83 // pred_check
              _
            $region90: #{tpu_custom_call.1} parent=83 // pred_check_branch
              %631 = sbr.rel target = $region92
            $region91: #{tpu_custom_call.1} parent=83 // pred_region
              %s633 = ssub.s32 256, 1
              loop: start=0, step=1, limit=1
              $region93: #{tpu_custom_call.1} parent=91 // loop_pre_header
                _
              $region94: #{tpu_custom_call.1} parent=91 // loop_header
                %s635 = sphi 0, %s639
                %p636 = scmp.ge.s32.totalorder %s635, 1
                %s640 = sphi %s625, %s625
                %s641 = sphi %s623, %s623
              $region95: #{tpu_custom_call.1} parent=91 // loop_header_branch
                %638 = sbr.rel (%p636) target = $region99
              $region96: #{tpu_custom_call.1} parent=91 // loop_body
                %v642 = vld [vmem:[%s640] sm:%s633]
                %643 = vst [vmem:[%s641] sm:%s633] %v642
                %v644 = vld [vmem:[%s640 + $0x10] sm:%s633]
                %645 = vst [vmem:[%s641 + $0x8] sm:%s633] %v644
                %v646 = vld [vmem:[%s640 + $0x20] sm:%s633]
                %647 = vst [vmem:[%s641 + $0x10] sm:%s633] %v646
                %v648 = vld [vmem:[%s640 + $0x30] sm:%s633]
                %649 = vst [vmem:[%s641 + $0x18] sm:%s633] %v648
              $region97: #{tpu_custom_call.1} parent=91 // loop_footer
                %s639 = sadd.s32 1, %s635
              $region98: #{tpu_custom_call.1} parent=91 // loop_footer_branch
                %634 = sbr.rel target = $region94
              $region99: #{tpu_custom_call.1} parent=91 // loop_exit
                _
            $region92: #{tpu_custom_call.1} parent=83 // pred_fallthru
              _
          $region84: #{tpu_custom_call.1} parent=79 // pred_fallthru
            _
          %670 = vnop
        $region80: #{tpu_custom_call.1} parent=71 // pred_fallthru
          _
        // Predicated region
        $region115: #{tpu_custom_call.1} parent=71 // pred_check
          %p671 = pneg %p111
        $region116: #{tpu_custom_call.1} parent=71 // pred_check_branch
          %673 = sbr.rel (%p671) target = $region118
        $region117: #{tpu_custom_call.1} parent=71 // pred_region
          %s674 = sand.u32 %s101, 1
          %s675 = sand.u32 %s101, 1
          %s676 = smul.addr %s675, 32
          %s677 = scalar_lea.vmem [#allocation6], %s676
          %s678 = smul.addr %s39, 8
          %s679 = scalar_lea.vmem %s2, %s678
          // Predicated region
          $region119: #{tpu_custom_call.1} parent=117 // pred_check
            _
          $region120: #{tpu_custom_call.1} parent=117 // pred_check_branch
            %681 = sbr.rel (0) target = $region122
          $region121: #{tpu_custom_call.1} parent=117 // pred_region
            // Predicated region
            $region123: #{tpu_custom_call.1} parent=121 // pred_check
              _
            $region124: #{tpu_custom_call.1} parent=121 // pred_check_branch
              %683 = sbr.rel (0) target = $region126
            $region125: #{tpu_custom_call.1} parent=121 // pred_region
              // Predicated region
              $region138: #{tpu_custom_call.1} parent=125 // pred_check
                _
              $region139: #{tpu_custom_call.1} parent=125 // pred_check_branch
                %705 = sbr.rel (0) target = $region141
              $region140: #{tpu_custom_call.1} parent=125 // pred_region
                loop: start=0, step=1, limit=1
                $region142: #{tpu_custom_call.1} parent=140 // loop_pre_header
                  _
                $region143: #{tpu_custom_call.1} parent=140 // loop_header
                  %s707 = sphi 0, %s711
                  %p708 = scmp.ge.s32.totalorder %s707, 1
                  %s712 = sphi %s679, %s679
                  %s713 = sphi %s677, %s677
                $region144: #{tpu_custom_call.1} parent=140 // loop_header_branch
                  %710 = sbr.rel (%p708) target = $region148
                $region145: #{tpu_custom_call.1} parent=140 // loop_body
                  %v714 = vld [vmem:[%s712] sm:$0xff]
                  %715 = vst [vmem:[%s713] sm:$0xff] %v714
                  %v716 = vld [vmem:[%s712 + $0x10] sm:$0xff]
                  %717 = vst [vmem:[%s713 + $0x8] sm:$0xff] %v716
                  %v718 = vld [vmem:[%s712 + $0x20] sm:$0xff]
                  %719 = vst [vmem:[%s713 + $0x10] sm:$0xff] %v718
                  %v720 = vld [vmem:[%s712 + $0x30] sm:$0xff]
                  %721 = vst [vmem:[%s713 + $0x18] sm:$0xff] %v720
                $region146: #{tpu_custom_call.1} parent=140 // loop_footer
                  %s711 = sadd.s32 1, %s707
                $region147: #{tpu_custom_call.1} parent=140 // loop_footer_branch
                  %706 = sbr.rel target = $region143
                $region148: #{tpu_custom_call.1} parent=140 // loop_exit
                  _
              $region141: #{tpu_custom_call.1} parent=125 // pred_fallthru
                _
              // Predicated region
              $region149: #{tpu_custom_call.1} parent=125 // pred_check
                _
              $region150: #{tpu_custom_call.1} parent=125 // pred_check_branch
                %723 = sbr.rel target = $region152
              $region151: #{tpu_custom_call.1} parent=125 // pred_region
                _
              $region152: #{tpu_custom_call.1} parent=125 // pred_fallthru
                _
            $region126: #{tpu_custom_call.1} parent=121 // pred_fallthru
              _
            // Predicated region
            $region127: #{tpu_custom_call.1} parent=121 // pred_check
              _
            $region128: #{tpu_custom_call.1} parent=121 // pred_check_branch
              %685 = sbr.rel target = $region130
            $region129: #{tpu_custom_call.1} parent=121 // pred_region
              %s687 = ssub.s32 256, 1
              loop: start=0, step=1, limit=1
              $region131: #{tpu_custom_call.1} parent=129 // loop_pre_header
                _
              $region132: #{tpu_custom_call.1} parent=129 // loop_header
                %s689 = sphi 0, %s693
                %p690 = scmp.ge.s32.totalorder %s689, 1
                %s694 = sphi %s679, %s679
                %s695 = sphi %s677, %s677
              $region133: #{tpu_custom_call.1} parent=129 // loop_header_branch
                %692 = sbr.rel (%p690) target = $region137
              $region134: #{tpu_custom_call.1} parent=129 // loop_body
                %v696 = vld [vmem:[%s694] sm:%s687]
                %697 = vst [vmem:[%s695] sm:%s687] %v696
                %v698 = vld [vmem:[%s694 + $0x10] sm:%s687]
                %699 = vst [vmem:[%s695 + $0x8] sm:%s687] %v698
                %v700 = vld [vmem:[%s694 + $0x20] sm:%s687]
                %701 = vst [vmem:[%s695 + $0x10] sm:%s687] %v700
                %v702 = vld [vmem:[%s694 + $0x30] sm:%s687]
                %703 = vst [vmem:[%s695 + $0x18] sm:%s687] %v702
              $region135: #{tpu_custom_call.1} parent=129 // loop_footer
                %s693 = sadd.s32 1, %s689
              $region136: #{tpu_custom_call.1} parent=129 // loop_footer_branch
                %688 = sbr.rel target = $region132
              $region137: #{tpu_custom_call.1} parent=129 // loop_exit
                _
            $region130: #{tpu_custom_call.1} parent=121 // pred_fallthru
              _
          $region122: #{tpu_custom_call.1} parent=117 // pred_fallthru
            _
          %724 = vnop
        $region118: #{tpu_custom_call.1} parent=71 // pred_fallthru
          _
        // Predicated region
        $region153: #{tpu_custom_call.1} parent=71 // pred_check
          %p725 = pneg %p137
        $region154: #{tpu_custom_call.1} parent=71 // pred_check_branch
          %727 = sbr.rel (%p725) target = $region156
        $region155: #{tpu_custom_call.1} parent=71 // pred_region
          %s728 = sand.u32 %s39, 1
          %s729 = scalar_lea.sflag [#allocation8], %s728
          %s730 = sand.u32 %s127, 1
          %s731 = smul.addr %s730, 32
          %s732 = scalar_lea.vmem [#allocation7], %s731
          %734 = vsyncadd %s729, 0
          %s735 = smul.addr %s39, 8
          %s736 = scalar_lea.hbm %s3, %s735
          %s737 = sshll.u32 %s736, 4
          %s738 = int_to_ptr.hbm [resolvable:$true] %s737
          %s739 = sshll.u32 %s732, 4
          %s740 = int_to_ptr.vmem [resolvable:$true] %s739
          %745 = dma.hbm_to_vmem [thread:$0]  %s738, 512, %s740, %s729, 256, 128, 8
        $region156: #{tpu_custom_call.1} parent=71 // pred_fallthru
          _
        // Predicated region
        $region157: #{tpu_custom_call.1} parent=71 // pred_check
          %p746 = pneg %p163
        $region158: #{tpu_custom_call.1} parent=71 // pred_check_branch
          %748 = sbr.rel (%p746) target = $region160
        $region159: #{tpu_custom_call.1} parent=71 // pred_region
          %s749 = sand.u32 %s39, 1
          %s750 = scalar_lea.sflag [#allocation8], %s749
          %s751 = sand.u32 %s153, 1
          %s752 = smul.addr %s751, 2
          %s753 = scalar_lea.vmem [#allocation9], %s752
          %755 = vsyncadd %s750, 0
          %s756 = smul.addr %s39, 2
          %s757 = scalar_lea.hbm %s4, %s756
          %s759 = sshll.u32 %s757, 4
          %s760 = int_to_ptr.hbm [resolvable:$true] %s759
          %s761 = sshll.u32 %s753, 4
          %s762 = int_to_ptr.vmem [resolvable:$true] %s761
          %764 = dma.hbm_to_vmem [thread:$0]  %s760, 32, %s762, %s750
        $region160: #{tpu_custom_call.1} parent=71 // pred_fallthru
          _
        // Predicated region
        $region161: #{tpu_custom_call.1} parent=71 // pred_check
          %p765 = pneg %p189
        $region162: #{tpu_custom_call.1} parent=71 // pred_check_branch
          %767 = sbr.rel (%p765) target = $region164
        $region163: #{tpu_custom_call.1} parent=71 // pred_region
          %s768 = sand.u32 %s39, 1
          %s769 = scalar_lea.sflag [#allocation11], %s768
          %s770 = sand.u32 %s179, 1
          %s771 = smul.addr %s770, 2
          %s772 = scalar_lea.vmem [#allocation10], %s771
          %774 = vsyncadd %s769, 0
          %s775 = smul.addr %s39, 2
          %s776 = scalar_lea.hbm %s5, %s775
          %s778 = sshll.u32 %s776, 4
          %s779 = int_to_ptr.hbm [resolvable:$true] %s778
          %s780 = sshll.u32 %s772, 4
          %s781 = int_to_ptr.vmem [resolvable:$true] %s780
          %783 = dma.hbm_to_vmem [thread:$0]  %s779, 32, %s781, %s769
        $region164: #{tpu_custom_call.1} parent=71 // pred_fallthru
          _
      $region72: #{tpu_custom_call.1} parent=5 // pred_fallthru
        _
      %p784 = scmp.le.s32.totalorder 1, %s39
      %p785 = scmp.lt.s32.totalorder %s39, 3
      %p786 = pnand %p784, %p785
      %p787 = pneg %p786
      // Predicated region
      $region165: #{tpu_custom_call.1} parent=5 // pred_check
        _
      $region166: #{tpu_custom_call.1} parent=5 // pred_check_branch
        %789 = sbr.rel (%p786) target = $region168
      $region167: #{tpu_custom_call.1} parent=5 // pred_region
        %s790 = ssub.s32 %s39, 1
        %s791 = sand.u32 %s52, 1
        %s792 = scalar_lea.sflag [#allocation3], %s791
        %s793 = sand.u32 %s52, 1
        %s794 = smul.addr %s793, 8
        %s795 = scalar_lea.vmem [#allocation2], %s794
        // Predicated region
        $region169: #{tpu_custom_call.1} parent=167 // pred_check
          %p796 = pneg %p65
        $region170: #{tpu_custom_call.1} parent=167 // pred_check_branch
          %798 = sbr.rel (%p796) target = $region172
        $region171: #{tpu_custom_call.1} parent=167 // pred_region
          %800 = dma.done %s792, 128
        $region172: #{tpu_custom_call.1} parent=167 // pred_fallthru
          _
        %s801 = sand.u32 %s78, 1
        %s802 = sand.u32 %s78, 1
        %s803 = smul.addr %s802, 32
        %s804 = scalar_lea.vmem [#allocation5], %s803
        // Predicated region
        $region173: #{tpu_custom_call.1} parent=167 // pred_check
          %p805 = pneg %p91
        $region174: #{tpu_custom_call.1} parent=167 // pred_check_branch
          %807 = sbr.rel (%p805) target = $region176
        $region175: #{tpu_custom_call.1} parent=167 // pred_region
          _
        $region176: #{tpu_custom_call.1} parent=167 // pred_fallthru
          _
        %s808 = sand.u32 %s104, 1
        %s809 = sand.u32 %s104, 1
        %s810 = smul.addr %s809, 32
        %s811 = scalar_lea.vmem [#allocation6], %s810
        // Predicated region
        $region177: #{tpu_custom_call.1} parent=167 // pred_check
          %p812 = pneg %p117
        $region178: #{tpu_custom_call.1} parent=167 // pred_check_branch
          %814 = sbr.rel (%p812) target = $region180
        $region179: #{tpu_custom_call.1} parent=167 // pred_region
          _
        $region180: #{tpu_custom_call.1} parent=167 // pred_fallthru
          _
        %s815 = sand.u32 %s44, 1
        %s816 = scalar_lea.sflag [#allocation8], %s815
        %s817 = sand.u32 %s130, 1
        %s818 = smul.addr %s817, 32
        %s819 = scalar_lea.vmem [#allocation7], %s818
        // Predicated region
        $region181: #{tpu_custom_call.1} parent=167 // pred_check
          %p820 = pneg %p143
        $region182: #{tpu_custom_call.1} parent=167 // pred_check_branch
          %822 = sbr.rel (%p820) target = $region184
        $region183: #{tpu_custom_call.1} parent=167 // pred_region
          %824 = dma.done %s816, 512
        $region184: #{tpu_custom_call.1} parent=167 // pred_fallthru
          _
        %s825 = sand.u32 %s44, 1
        %s826 = scalar_lea.sflag [#allocation8], %s825
        %s827 = sand.u32 %s156, 1
        %s828 = smul.addr %s827, 2
        %s829 = scalar_lea.vmem [#allocation9], %s828
        // Predicated region
        $region185: #{tpu_custom_call.1} parent=167 // pred_check
          %p830 = pneg %p169
        $region186: #{tpu_custom_call.1} parent=167 // pred_check_branch
          %832 = sbr.rel (%p830) target = $region188
        $region187: #{tpu_custom_call.1} parent=167 // pred_region
          %834 = dma.done %s826, 32
        $region188: #{tpu_custom_call.1} parent=167 // pred_fallthru
          _
        %s835 = sand.u32 %s44, 1
        %s836 = scalar_lea.sflag [#allocation11], %s835
        %s837 = sand.u32 %s182, 1
        %s838 = smul.addr %s837, 2
        %s839 = scalar_lea.vmem [#allocation10], %s838
        // Predicated region
        $region189: #{tpu_custom_call.1} parent=167 // pred_check
          %p840 = pneg %p195
        $region190: #{tpu_custom_call.1} parent=167 // pred_check_branch
          %842 = sbr.rel (%p840) target = $region192
        $region191: #{tpu_custom_call.1} parent=167 // pred_region
          %844 = dma.done %s836, 32
        $region192: #{tpu_custom_call.1} parent=167 // pred_fallthru
          _
        // Predicated region
        $region193: #{tpu_custom_call.1} parent=167 // pred_check
          %p845 = pneg %p300
        $region194: #{tpu_custom_call.1} parent=167 // pred_check_branch
          %847 = sbr.rel (%p845) target = $region196
        $region195: #{tpu_custom_call.1} parent=167 // pred_region
          %849 = dma.done [#allocation11], 512
        $region196: #{tpu_custom_call.1} parent=167 // pred_fallthru
          _
        // Predicated region
        $region197: #{tpu_custom_call.1} parent=167 // pred_check
          %p850 = pneg %p384
        $region198: #{tpu_custom_call.1} parent=167 // pred_check_branch
          %852 = sbr.rel (%p850) target = $region200
        $region199: #{tpu_custom_call.1} parent=167 // pred_region
          %854 = dma.done [#allocation14], 512
        $region200: #{tpu_custom_call.1} parent=167 // pred_fallthru
          _
        %s855 = sand.u32 %s52, 1
        %s856 = scalar_lea.sflag [#allocation3], %s855
        %s857 = sand.u32 %s52, 1
        %s858 = smul.addr %s857, 8
        %s859 = scalar_lea.vmem [#allocation2], %s858
        %p860 = pneg %p65
        %p861 = pneg %p62
        %s862 = sand.u32 %s78, 1
        %s863 = sand.u32 %s78, 1
        %s864 = smul.addr %s863, 32
        %s865 = scalar_lea.vmem [#allocation5], %s864
        %p866 = pneg %p91
        %p867 = pneg %p88
        %s868 = sand.u32 %s104, 1
        %s869 = sand.u32 %s104, 1
        %s870 = smul.addr %s869, 32
        %s871 = scalar_lea.vmem [#allocation6], %s870
        %p872 = pneg %p117
        %p873 = pneg %p114
        %s874 = sand.u32 %s44, 1
        %s875 = scalar_lea.sflag [#allocation8], %s874
        %s876 = sand.u32 %s130, 1
        %s877 = smul.addr %s876, 32
        %s878 = scalar_lea.vmem [#allocation7], %s877
        %p879 = pneg %p143
        %p880 = pneg %p140
        %s881 = sand.u32 %s44, 1
        %s882 = scalar_lea.sflag [#allocation8], %s881
        %s883 = sand.u32 %s156, 1
        %s884 = smul.addr %s883, 2
        %s885 = scalar_lea.vmem [#allocation9], %s884
        %p886 = pneg %p169
        %p887 = pneg %p166
        %s888 = sand.u32 %s44, 1
        %s889 = scalar_lea.sflag [#allocation11], %s888
        %s890 = sand.u32 %s182, 1
        %s891 = smul.addr %s890, 2
        %s892 = scalar_lea.vmem [#allocation10], %s891
        %p893 = pneg %p195
        %p894 = pneg %p192
        %p895 = pneg %p216
        %p896 = pneg %p213
        %p897 = pneg %p237
        %p898 = pneg %p234
        %p899 = pneg %p258
        %p900 = pneg %p255
        %p901 = pneg %p279
        %p902 = pneg %p276
        %p903 = pneg %p300
        %p904 = pneg %p297
        %p905 = pneg %p321
        %p906 = pneg %p318
        %p907 = pneg %p342
        %p908 = pneg %p339
        %p909 = pneg %p363
        %p910 = pneg %p360
        %p911 = pneg %p384
        %p912 = pneg %p381
        %p913 = pneg %p405
        %p914 = pneg %p402
        %p915 = pneg %p426
        %p916 = pneg %p423
        %p917 = pneg %p447
        %p918 = pneg %p444
        %p919 = pneg %p468
        %p920 = pneg %p465
        %p921 = pneg %p489
        %p922 = pneg %p486
        %p923 = pneg %p515
        %p924 = pneg %p512
        %s925 = sand.u32 %s502, 1
        %s926 = scalar_lea.sflag [#allocation4], %s925
        %s927 = sand.u32 %s502, 1
        %s928 = smul.addr %s927, 8
        %s929 = scalar_lea.vmem [#allocation15], %s928
        %v932 = vld [vmem:[%s804] sm:$0xff]
        %v933 = vld [vmem:[%s804 + $0x8] sm:$0xff]
        %v934 = vld [vmem:[%s804 + $0x10] sm:$0xff]
        %v935 = vld [vmem:[%s804 + $0x18] sm:$0xff]
        %v936 = vmul.f32 %v932, 0.17677669
        %v937 = vmul.f32 %v933, 0.17677669
        %v938 = vmul.f32 %v934, 0.17677669
        %v939 = vmul.f32 %v935, 0.17677669
        %v940 = vld [vmem:[%s829] sm:$0x3]
        %vm941 = vnez %v940
        %v942 = vld [vmem:[%s6] sm:$0xff]
        %v943 = vld [vmem:[%s6 + $0x8] sm:$0xff]
        %v944 = vld [vmem:[%s6 + $0x10] sm:$0xff]
        %v945 = vld [vmem:[%s6 + $0x18] sm:$0xff]
        %v946 = vld [vmem:[%s7] sm:$0x1]
        %vm947 = vcmask 64512
        %v949 = vsel %vm947, %v936, 0
        %v952 = vsel %vm947, %v932, 0
        %954 = vmatpush.xpose.msra.mxu0 0.0
        %955 = vmatpush.xpose.msra.mxu0 0.0
        %956 = vmatpush.xpose.msra.mxu0 0.0
        %957 = vmatpush.xpose.msra.mxu0 0.0
        %958 = vmatpush.xpose.msra.mxu0 0.0
        %959 = vmatpush.xpose.msra.mxu0 0.0
        %960 = vmatpush.xpose.msra.mxu0 0.0
        %961 = vmatpush.xpose.msra.mxu0 0.0
        %962 = vmatpush.xpose.msra.mxu0 0.0
        %963 = vmatpush.xpose.msra.mxu0 0.0
        %964 = vmatpush.xpose.msra.mxu0 0.0
        %965 = vmatpush.xpose.msra.mxu0 0.0
        %966 = vmatpush.xpose.msra.mxu0 0.0
        %967 = vmatpush.xpose.msra.mxu0 0.0
        %968 = vmatpush.xpose.msra.mxu0 0.0
        %969 = vmatpush.xpose.msra.mxu0 %v952
        %970 = vmatmul.f32.gmra.mxu0 %v949
        %v971 = vpop.f32.mrf.mxu0
        %v972 = vadd.f32 0.0, %v971
        %973 = vdwg.mxu0
        %v975 = vsel %vm947, %v937, 0
        %v978 = vsel %vm947, %v933, 0
        %980 = vmatpush.xpose.msra.mxu0 0.0
        %981 = vmatpush.xpose.msra.mxu0 0.0
        %982 = vmatpush.xpose.msra.mxu0 0.0
        %983 = vmatpush.xpose.msra.mxu0 0.0
        %984 = vmatpush.xpose.msra.mxu0 0.0
        %985 = vmatpush.xpose.msra.mxu0 0.0
        %986 = vmatpush.xpose.msra.mxu0 0.0
        %987 = vmatpush.xpose.msra.mxu0 0.0
        %988 = vmatpush.xpose.msra.mxu0 0.0
        %989 = vmatpush.xpose.msra.mxu0 0.0
        %990 = vmatpush.xpose.msra.mxu0 0.0
        %991 = vmatpush.xpose.msra.mxu0 0.0
        %992 = vmatpush.xpose.msra.mxu0 0.0
        %993 = vmatpush.xpose.msra.mxu0 0.0
        %994 = vmatpush.xpose.msra.mxu0 0.0
        %995 = vmatpush.xpose.msra.mxu0 %v978
        %996 = vmatmul.f32.gmra.mxu0 %v975
        %v997 = vpop.f32.mrf.mxu0
        %v998 = vadd.f32 0.0, %v997
        %999 = vdwg.mxu0
        %v1001 = vsel %vm947, %v938, 0
        %v1004 = vsel %vm947, %v934, 0
        %1006 = vmatpush.xpose.msra.mxu0 0.0
        %1007 = vmatpush.xpose.msra.mxu0 0.0
        %1008 = vmatpush.xpose.msra.mxu0 0.0
        %1009 = vmatpush.xpose.msra.mxu0 0.0
        %1010 = vmatpush.xpose.msra.mxu0 0.0
        %1011 = vmatpush.xpose.msra.mxu0 0.0
        %1012 = vmatpush.xpose.msra.mxu0 0.0
        %1013 = vmatpush.xpose.msra.mxu0 0.0
        %1014 = vmatpush.xpose.msra.mxu0 0.0
        %1015 = vmatpush.xpose.msra.mxu0 0.0
        %1016 = vmatpush.xpose.msra.mxu0 0.0
        %1017 = vmatpush.xpose.msra.mxu0 0.0
        %1018 = vmatpush.xpose.msra.mxu0 0.0
        %1019 = vmatpush.xpose.msra.mxu0 0.0
        %1020 = vmatpush.xpose.msra.mxu0 0.0
        %1021 = vmatpush.xpose.msra.mxu0 %v1004
        %1022 = vmatmul.f32.gmra.mxu0 %v1001
        %v1023 = vpop.f32.mrf.mxu0
        %v1024 = vadd.f32 0.0, %v1023
        %1025 = vdwg.mxu0
        %v1027 = vsel %vm947, %v939, 0
        %v1030 = vsel %vm947, %v935, 0
        %1032 = vmatpush.xpose.msra.mxu0 0.0
        %1033 = vmatpush.xpose.msra.mxu0 0.0
        %1034 = vmatpush.xpose.msra.mxu0 0.0
        %1035 = vmatpush.xpose.msra.mxu0 0.0
        %1036 = vmatpush.xpose.msra.mxu0 0.0
        %1037 = vmatpush.xpose.msra.mxu0 0.0
        %1038 = vmatpush.xpose.msra.mxu0 0.0
        %1039 = vmatpush.xpose.msra.mxu0 0.0
        %1040 = vmatpush.xpose.msra.mxu0 0.0
        %1041 = vmatpush.xpose.msra.mxu0 0.0
        %1042 = vmatpush.xpose.msra.mxu0 0.0
        %1043 = vmatpush.xpose.msra.mxu0 0.0
        %1044 = vmatpush.xpose.msra.mxu0 0.0
        %1045 = vmatpush.xpose.msra.mxu0 0.0
        %1046 = vmatpush.xpose.msra.mxu0 0.0
        %1047 = vmatpush.xpose.msra.mxu0 %v1030
        %1048 = vmatmul.f32.gmra.mxu0 %v1027
        %v1049 = vpop.f32.mrf.mxu0
        %v1050 = vadd.f32 0.0, %v1049
        %1051 = vdwg.mxu0
        %v1052 = vsel %vm941, 16843009, 0
        %v1053 = vunpack.c.0.s8 %v1052
        %vm1054 = vcmp.ne.s32.totalorder %v1053, 0
        %v1055 = vsel %vm1054, 1, 0
        %vm1056 = vcmp.eq.s32.totalorder %v1055, 1
        %v1057 = vsel %vm1056, %v972, -1e+20
        %v1058 = vsel %vm1056, %v998, -1e+20
        %v1059 = vsel %vm1056, %v1024, -1e+20
        %v1060 = vsel %vm1056, %v1050, -1e+20
        %v1061 = vsel %vm947, %v1057, -inf
        %1062 = vmax.xlane.f32.xlu0 %v1061
        %v1063 = vpop.xlane.xlu0 %1062
        %v1064 = vsel %vm947, %v1058, -inf
        %1065 = vmax.xlane.f32.xlu0 %v1064
        %v1066 = vpop.xlane.xlu0 %1065
        %v1067 = vsel %vm947, %v1059, -inf
        %1068 = vmax.xlane.f32.xlu0 %v1067
        %v1069 = vpop.xlane.xlu0 %1068
        %v1070 = vsel %vm947, %v1060, -inf
        %1071 = vmax.xlane.f32.xlu0 %v1070
        %v1072 = vpop.xlane.xlu0 %1071
        %v1073 = vsub.f32 %v1057, %v1063
        %v1074 = vsub.f32 %v1058, %v1066
        %v1075 = vsub.f32 %v1059, %v1069
        %v1076 = vsub.f32 %v1060, %v1072
        %v1077 = vmul.f32 %v1073, 1.442695
        %v1078 = vpow.pop %v1077
        %v1079 = vmul.f32 %v1074, 1.442695
        %v1080 = vpow.pop %v1079
        %v1081 = vmul.f32 %v1075, 1.442695
        %v1082 = vpow.pop %v1081
        %v1083 = vmul.f32 %v1076, 1.442695
        %v1084 = vpow.pop %v1083
        %v1085 = vsel %vm947, %v1078, 0.0
        %1086 = vadd.xlane.f32.xlu0 %v1085
        %v1087 = vpop.xlane.xlu0 %1086
        %v1088 = vsel %vm947, %v1080, 0.0
        %1089 = vadd.xlane.f32.xlu0 %v1088
        %v1090 = vpop.xlane.xlu0 %1089
        %v1091 = vsel %vm947, %v1082, 0.0
        %1092 = vadd.xlane.f32.xlu0 %v1091
        %v1093 = vpop.xlane.xlu0 %1092
        %v1094 = vsel %vm947, %v1084, 0.0
        %1095 = vadd.xlane.f32.xlu0 %v1094
        %v1096 = vpop.xlane.xlu0 %1095
        %v1097 = vrcp.pop %v1087
        %v1098 = vmul.f32 %v1087, %v1097
        %v1099 = vsub.f32 1.0, %v1098
        %v1100 = vmul.f32 %v1097, %v1099
        %v1101 = vadd.f32 %v1097, %v1100
        %vm1102 = vweird.f32 %v1087
        %vm1103 = vweird.f32 %v1097
        %vm1104 = vmor %vm1102, %vm1103
        %v1105 = vsel %vm1104, %v1097, %v1101
        %v1106 = vand.u32 2147483647, %v1087
        %vm1107 = vcmp.eq.f32.partialorder %v1106, 8.507059e+37
        %v1108 = vand.u32 %v1087, 2147483648
        %v1109 = vor.u32 1.1754944e-38, %v1108
        %v1110 = vsel %vm1107, %v1109, %v1105
        %v1111 = vrcp.pop %v1090
        %v1112 = vmul.f32 %v1090, %v1111
        %v1113 = vsub.f32 1.0, %v1112
        %v1114 = vmul.f32 %v1111, %v1113
        %v1115 = vadd.f32 %v1111, %v1114
        %vm1116 = vweird.f32 %v1090
        %vm1117 = vweird.f32 %v1111
        %vm1118 = vmor %vm1116, %vm1117
        %v1119 = vsel %vm1118, %v1111, %v1115
        %v1120 = vand.u32 2147483647, %v1090
        %vm1121 = vcmp.eq.f32.partialorder %v1120, 8.507059e+37
        %v1122 = vand.u32 %v1090, 2147483648
        %v1123 = vor.u32 1.1754944e-38, %v1122
        %v1124 = vsel %vm1121, %v1123, %v1119
        %v1125 = vrcp.pop %v1093
        %v1126 = vmul.f32 %v1093, %v1125
        %v1127 = vsub.f32 1.0, %v1126
        %v1128 = vmul.f32 %v1125, %v1127
        %v1129 = vadd.f32 %v1125, %v1128
        %vm1130 = vweird.f32 %v1093
        %vm1131 = vweird.f32 %v1125
        %vm1132 = vmor %vm1130, %vm1131
        %v1133 = vsel %vm1132, %v1125, %v1129
        %v1134 = vand.u32 2147483647, %v1093
        %vm1135 = vcmp.eq.f32.partialorder %v1134, 8.507059e+37
        %v1136 = vand.u32 %v1093, 2147483648
        %v1137 = vor.u32 1.1754944e-38, %v1136
        %v1138 = vsel %vm1135, %v1137, %v1133
        %v1139 = vrcp.pop %v1096
        %v1140 = vmul.f32 %v1096, %v1139
        %v1141 = vsub.f32 1.0, %v1140
        %v1142 = vmul.f32 %v1139, %v1141
        %v1143 = vadd.f32 %v1139, %v1142
        %vm1144 = vweird.f32 %v1096
        %vm1145 = vweird.f32 %v1139
        %vm1146 = vmor %vm1144, %vm1145
        %v1147 = vsel %vm1146, %v1139, %v1143
        %v1148 = vand.u32 2147483647, %v1096
        %vm1149 = vcmp.eq.f32.partialorder %v1148, 8.507059e+37
        %v1150 = vand.u32 %v1096, 2147483648
        %v1151 = vor.u32 1.1754944e-38, %v1150
        %v1152 = vsel %vm1149, %v1151, %v1147
        %v1153 = vmul.f32 %v1078, %v1110
        %v1154 = vmul.f32 %v1080, %v1124
        %v1155 = vmul.f32 %v1082, %v1138
        %v1156 = vmul.f32 %v1084, %v1152
        %v1158 = vsel %vm947, %v1153, 0
        %1160 = vmatpush.msra.mxu0 0.0
        %1161 = vmatpush.msra.mxu0 0.0
        %1162 = vmatpush.msra.mxu0 0.0
        %1163 = vmatpush.msra.mxu0 0.0
        %1164 = vmatpush.msra.mxu0 0.0
        %1165 = vmatpush.msra.mxu0 0.0
        %1166 = vmatpush.msra.mxu0 0.0
        %1167 = vmatpush.msra.mxu0 0.0
        %1168 = vmatpush.msra.mxu0 0.0
        %1169 = vmatpush.msra.mxu0 0.0
        %1170 = vmatpush.msra.mxu0 0.0
        %1171 = vmatpush.msra.mxu0 0.0
        %1172 = vmatpush.msra.mxu0 0.0
        %1173 = vmatpush.msra.mxu0 0.0
        %1174 = vmatpush.msra.mxu0 0.0
        %1175 = vmatpush.msra.mxu0 %v932
        %1176 = vmatmul.f32.gmra.mxu0 %v1158
        %v1177 = vpop.f32.mrf.mxu0
        %v1178 = vadd.f32 0.0, %v1177
        %1179 = vdwg.mxu0
        %v1181 = vsel %vm947, %v1154, 0
        %1183 = vmatpush.msra.mxu0 0.0
        %1184 = vmatpush.msra.mxu0 0.0
        %1185 = vmatpush.msra.mxu0 0.0
        %1186 = vmatpush.msra.mxu0 0.0
        %1187 = vmatpush.msra.mxu0 0.0
        %1188 = vmatpush.msra.mxu0 0.0
        %1189 = vmatpush.msra.mxu0 0.0
        %1190 = vmatpush.msra.mxu0 0.0
        %1191 = vmatpush.msra.mxu0 0.0
        %1192 = vmatpush.msra.mxu0 0.0
        %1193 = vmatpush.msra.mxu0 0.0
        %1194 = vmatpush.msra.mxu0 0.0
        %1195 = vmatpush.msra.mxu0 0.0
        %1196 = vmatpush.msra.mxu0 0.0
        %1197 = vmatpush.msra.mxu0 0.0
        %1198 = vmatpush.msra.mxu0 %v933
        %1199 = vmatmul.f32.gmra.mxu0 %v1181
        %v1200 = vpop.f32.mrf.mxu0
        %v1201 = vadd.f32 0.0, %v1200
        %1202 = vdwg.mxu0
        %v1204 = vsel %vm947, %v1155, 0
        %1206 = vmatpush.msra.mxu0 0.0
        %1207 = vmatpush.msra.mxu0 0.0
        %1208 = vmatpush.msra.mxu0 0.0
        %1209 = vmatpush.msra.mxu0 0.0
        %1210 = vmatpush.msra.mxu0 0.0
        %1211 = vmatpush.msra.mxu0 0.0
        %1212 = vmatpush.msra.mxu0 0.0
        %1213 = vmatpush.msra.mxu0 0.0
        %1214 = vmatpush.msra.mxu0 0.0
        %1215 = vmatpush.msra.mxu0 0.0
        %1216 = vmatpush.msra.mxu0 0.0
        %1217 = vmatpush.msra.mxu0 0.0
        %1218 = vmatpush.msra.mxu0 0.0
        %1219 = vmatpush.msra.mxu0 0.0
        %1220 = vmatpush.msra.mxu0 0.0
        %1221 = vmatpush.msra.mxu0 %v934
        %1222 = vmatmul.f32.gmra.mxu0 %v1204
        %v1223 = vpop.f32.mrf.mxu0
        %v1224 = vadd.f32 0.0, %v1223
        %1225 = vdwg.mxu0
        %v1227 = vsel %vm947, %v1156, 0
        %1229 = vmatpush.msra.mxu0 0.0
        %1230 = vmatpush.msra.mxu0 0.0
        %1231 = vmatpush.msra.mxu0 0.0
        %1232 = vmatpush.msra.mxu0 0.0
        %1233 = vmatpush.msra.mxu0 0.0
        %1234 = vmatpush.msra.mxu0 0.0
        %1235 = vmatpush.msra.mxu0 0.0
        %1236 = vmatpush.msra.mxu0 0.0
        %1237 = vmatpush.msra.mxu0 0.0
        %1238 = vmatpush.msra.mxu0 0.0
        %1239 = vmatpush.msra.mxu0 0.0
        %1240 = vmatpush.msra.mxu0 0.0
        %1241 = vmatpush.msra.mxu0 0.0
        %1242 = vmatpush.msra.mxu0 0.0
        %1243 = vmatpush.msra.mxu0 0.0
        %1244 = vmatpush.msra.mxu0 %v935
        %1245 = vmatmul.f32.gmra.mxu0 %v1227
        %v1246 = vpop.f32.mrf.mxu0
        %v1247 = vadd.f32 0.0, %v1246
        %1248 = vdwg.mxu0
        %v1250 = vsel %vm947, %v1178, 0
        %1252 = vmatpush.msra.mxu0 0.0
        %1253 = vmatpush.msra.mxu0 0.0
        %1254 = vmatpush.msra.mxu0 0.0
        %1255 = vmatpush.msra.mxu0 0.0
        %1256 = vmatpush.msra.mxu0 0.0
        %1257 = vmatpush.msra.mxu0 0.0
        %1258 = vmatpush.msra.mxu0 0.0
        %1259 = vmatpush.msra.mxu0 0.0
        %1260 = vmatpush.msra.mxu0 0.0
        %1261 = vmatpush.msra.mxu0 0.0
        %1262 = vmatpush.msra.mxu0 0.0
        %1263 = vmatpush.msra.mxu0 0.0
        %1264 = vmatpush.msra.mxu0 0.0
        %1265 = vmatpush.msra.mxu0 0.0
        %1266 = vmatpush.msra.mxu0 0.0
        %1267 = vmatpush.msra.mxu0 %v942
        %1268 = vmatmul.f32.gmra.mxu0 %v1250
        %v1269 = vpop.f32.mrf.mxu0
        %v1270 = vadd.f32 0.0, %v1269
        %1271 = vdwg.mxu0
        %v1273 = vsel %vm947, %v1201, 0
        %1275 = vmatpush.msra.mxu0 0.0
        %1276 = vmatpush.msra.mxu0 0.0
        %1277 = vmatpush.msra.mxu0 0.0
        %1278 = vmatpush.msra.mxu0 0.0
        %1279 = vmatpush.msra.mxu0 0.0
        %1280 = vmatpush.msra.mxu0 0.0
        %1281 = vmatpush.msra.mxu0 0.0
        %1282 = vmatpush.msra.mxu0 0.0
        %1283 = vmatpush.msra.mxu0 0.0
        %1284 = vmatpush.msra.mxu0 0.0
        %1285 = vmatpush.msra.mxu0 0.0
        %1286 = vmatpush.msra.mxu0 0.0
        %1287 = vmatpush.msra.mxu0 0.0
        %1288 = vmatpush.msra.mxu0 0.0
        %1289 = vmatpush.msra.mxu0 0.0
        %1290 = vmatpush.msra.mxu0 %v943
        %1291 = vmatmul.f32.gmra.mxu0 %v1273
        %v1292 = vpop.f32.mrf.mxu0
        %v1293 = vadd.f32 0.0, %v1292
        %1294 = vdwg.mxu0
        %v1296 = vsel %vm947, %v1224, 0
        %1298 = vmatpush.msra.mxu0 0.0
        %1299 = vmatpush.msra.mxu0 0.0
        %1300 = vmatpush.msra.mxu0 0.0
        %1301 = vmatpush.msra.mxu0 0.0
        %1302 = vmatpush.msra.mxu0 0.0
        %1303 = vmatpush.msra.mxu0 0.0
        %1304 = vmatpush.msra.mxu0 0.0
        %1305 = vmatpush.msra.mxu0 0.0
        %1306 = vmatpush.msra.mxu0 0.0
        %1307 = vmatpush.msra.mxu0 0.0
        %1308 = vmatpush.msra.mxu0 0.0
        %1309 = vmatpush.msra.mxu0 0.0
        %1310 = vmatpush.msra.mxu0 0.0
        %1311 = vmatpush.msra.mxu0 0.0
        %1312 = vmatpush.msra.mxu0 0.0
        %1313 = vmatpush.msra.mxu0 %v944
        %1314 = vmatmul.f32.gmra.mxu0 %v1296
        %v1315 = vpop.f32.mrf.mxu0
        %v1316 = vadd.f32 0.0, %v1315
        %1317 = vdwg.mxu0
        %v1319 = vsel %vm947, %v1247, 0
        %1321 = vmatpush.msra.mxu0 0.0
        %1322 = vmatpush.msra.mxu0 0.0
        %1323 = vmatpush.msra.mxu0 0.0
        %1324 = vmatpush.msra.mxu0 0.0
        %1325 = vmatpush.msra.mxu0 0.0
        %1326 = vmatpush.msra.mxu0 0.0
        %1327 = vmatpush.msra.mxu0 0.0
        %1328 = vmatpush.msra.mxu0 0.0
        %1329 = vmatpush.msra.mxu0 0.0
        %1330 = vmatpush.msra.mxu0 0.0
        %1331 = vmatpush.msra.mxu0 0.0
        %1332 = vmatpush.msra.mxu0 0.0
        %1333 = vmatpush.msra.mxu0 0.0
        %1334 = vmatpush.msra.mxu0 0.0
        %1335 = vmatpush.msra.mxu0 0.0
        %1336 = vmatpush.msra.mxu0 %v945
        %1337 = vmatmul.f32.gmra.mxu0 %v1319
        %v1338 = vpop.f32.mrf.mxu0
        %v1339 = vadd.f32 0.0, %v1338
        %1340 = vdwg.mxu0
        %vm1341 = vcmask 261120
        %v1342 = vsel %vm1341, %v1270, 0.0
        %v1343 = vsel %vm1341, %v1293, 0.0
        %v1344 = vadd.f32 %v1342, %v1343
        %v1345 = vsel %vm1341, %v1316, 0.0
        %v1346 = vadd.f32 %v1344, %v1345
        %v1347 = vsel %vm1341, %v1339, 0.0
        %v1348 = vadd.f32 %v1346, %v1347
        %v1350 = vperm.slane %v946, 0
        %v1352 = vadd.f32 %v1348, %v1350
        %v1353 = vld [vmem:[%s795] sm:$0xff]
        %v1354 = vadd.f32 %v1352, %v1353
        %v1355 = vld [vmem:[%s8] sm:$0x1]
        %v1356 = vld [vmem:[%s9] sm:$0x1]
        %v1357 = vsel %vm1341, %v1354, 0.0
        %1358 = vadd.xlane.f32.xlu0 %v1357
        %v1359 = vpop.xlane.xlu0 %1358
        %v1360 = vrcp.pop 32.0
        %v1361 = vmul.f32 32.0, %v1360
        %v1362 = vsub.f32 1.0, %v1361
        %v1363 = vmul.f32 %v1360, %v1362
        %v1364 = vadd.f32 %v1360, %v1363
        %vm1365 = vweird.f32 %v1360
        %v1366 = vsel %vm1365, %v1360, %v1364
        %v1367 = vmul.f32 %v1359, %v1366
        %v1368 = vsub.f32 %v1354, %v1367
        %v1369 = vmul.f32 %v1368, %v1368
        %v1370 = vsel %vm1341, %v1369, 0.0
        %1371 = vadd.xlane.f32.xlu0 %v1370
        %v1372 = vpop.xlane.xlu0 %1371
        %v1373 = vmul.f32 %v1372, %v1366
        %v1374 = vadd.f32 %v1373, 1e-05
        %v1375 = vrsqrt.pop %v1374
        %v1376 = vmul.f32 %v1375, %v1374
        %v1377 = vmul.f32 %v1376, %v1375
        %v1378 = vmul.f32 0.5, %v1377
        %v1379 = vsub.f32 1.5, %v1378
        %v1380 = vmul.f32 %v1375, %v1379
        %vm1381 = vweird.f32 %v1374
        %vm1382 = vweird.f32 %v1375
        %vm1383 = vmor %vm1381, %vm1382
        %v1384 = vsel %vm1383, %v1375, %v1380
        %v1385 = vmul.f32 %v1368, %v1384
        %v1387 = vperm.slane %v1355, 0
        %v1389 = vmul.f32 %v1385, %v1387
        %v1391 = vperm.slane %v1356, 0
        %v1393 = vadd.f32 %v1389, %v1391
        %1395 = vrot.lane.b32.xlu0 %v1393, 120
        %v1396 = vpop.permute.xlu0 %1395
        %1398 = vrot.lane.b32.xlu0 %v1393, 112
        %v1399 = vpop.permute.xlu0 %1398
        %1401 = vrot.lane.b32.xlu0 %v1393, 104
        %v1402 = vpop.permute.xlu0 %1401
        %v1404 = vmul.f32 %v1393, 0.17677669
        %v1405 = vmul.f32 %v1396, 0.17677669
        %v1406 = vmul.f32 %v1399, 0.17677669
        %v1407 = vmul.f32 %v1402, 0.17677669
        %v1408 = vld [vmem:[%s811] sm:$0xff]
        %v1409 = vld [vmem:[%s811 + $0x8] sm:$0xff]
        %v1410 = vld [vmem:[%s811 + $0x10] sm:$0xff]
        %v1411 = vld [vmem:[%s811 + $0x18] sm:$0xff]
        %v1412 = vld [vmem:[%s819] sm:$0xff]
        %v1413 = vld [vmem:[%s819 + $0x8] sm:$0xff]
        %v1414 = vld [vmem:[%s819 + $0x10] sm:$0xff]
        %v1415 = vld [vmem:[%s819 + $0x18] sm:$0xff]
        %v1416 = vld [vmem:[%s839] sm:$0x3]
        %vm1417 = vnez %v1416
        %v1418 = vld [vmem:[#allocation12] sm:$0xff]
        %v1419 = vld [vmem:[#allocation12 + $0x8] sm:$0xff]
        %v1420 = vld [vmem:[#allocation12 + $0x10] sm:$0xff]
        %v1421 = vld [vmem:[#allocation12 + $0x18] sm:$0xff]
        %v1422 = vld [vmem:[%s11] sm:$0x1]
        %v1424 = vsel %vm947, %v1404, 0
        %v1427 = vsel %vm947, %v1408, 0
        %1429 = vmatpush.xpose.msra.mxu0 0.0
        %1430 = vmatpush.xpose.msra.mxu0 0.0
        %1431 = vmatpush.xpose.msra.mxu0 0.0
        %1432 = vmatpush.xpose.msra.mxu0 0.0
        %1433 = vmatpush.xpose.msra.mxu0 0.0
        %1434 = vmatpush.xpose.msra.mxu0 0.0
        %1435 = vmatpush.xpose.msra.mxu0 0.0
        %1436 = vmatpush.xpose.msra.mxu0 0.0
        %1437 = vmatpush.xpose.msra.mxu0 0.0
        %1438 = vmatpush.xpose.msra.mxu0 0.0
        %1439 = vmatpush.xpose.msra.mxu0 0.0
        %1440 = vmatpush.xpose.msra.mxu0 0.0
        %1441 = vmatpush.xpose.msra.mxu0 0.0
        %1442 = vmatpush.xpose.msra.mxu0 0.0
        %1443 = vmatpush.xpose.msra.mxu0 0.0
        %1444 = vmatpush.xpose.msra.mxu0 %v1427
        %1445 = vmatmul.f32.gmra.mxu0 %v1424
        %v1446 = vpop.f32.mrf.mxu0
        %v1447 = vadd.f32 0.0, %v1446
        %1448 = vdwg.mxu0
        %v1450 = vsel %vm947, %v1405, 0
        %v1453 = vsel %vm947, %v1409, 0
        %1455 = vmatpush.xpose.msra.mxu0 0.0
        %1456 = vmatpush.xpose.msra.mxu0 0.0
        %1457 = vmatpush.xpose.msra.mxu0 0.0
        %1458 = vmatpush.xpose.msra.mxu0 0.0
        %1459 = vmatpush.xpose.msra.mxu0 0.0
        %1460 = vmatpush.xpose.msra.mxu0 0.0
        %1461 = vmatpush.xpose.msra.mxu0 0.0
        %1462 = vmatpush.xpose.msra.mxu0 0.0
        %1463 = vmatpush.xpose.msra.mxu0 0.0
        %1464 = vmatpush.xpose.msra.mxu0 0.0
        %1465 = vmatpush.xpose.msra.mxu0 0.0
        %1466 = vmatpush.xpose.msra.mxu0 0.0
        %1467 = vmatpush.xpose.msra.mxu0 0.0
        %1468 = vmatpush.xpose.msra.mxu0 0.0
        %1469 = vmatpush.xpose.msra.mxu0 0.0
        %1470 = vmatpush.xpose.msra.mxu0 %v1453
        %1471 = vmatmul.f32.gmra.mxu0 %v1450
        %v1472 = vpop.f32.mrf.mxu0
        %v1473 = vadd.f32 0.0, %v1472
        %1474 = vdwg.mxu0
        %v1476 = vsel %vm947, %v1406, 0
        %v1479 = vsel %vm947, %v1410, 0
        %1481 = vmatpush.xpose.msra.mxu0 0.0
        %1482 = vmatpush.xpose.msra.mxu0 0.0
        %1483 = vmatpush.xpose.msra.mxu0 0.0
        %1484 = vmatpush.xpose.msra.mxu0 0.0
        %1485 = vmatpush.xpose.msra.mxu0 0.0
        %1486 = vmatpush.xpose.msra.mxu0 0.0
        %1487 = vmatpush.xpose.msra.mxu0 0.0
        %1488 = vmatpush.xpose.msra.mxu0 0.0
        %1489 = vmatpush.xpose.msra.mxu0 0.0
        %1490 = vmatpush.xpose.msra.mxu0 0.0
        %1491 = vmatpush.xpose.msra.mxu0 0.0
        %1492 = vmatpush.xpose.msra.mxu0 0.0
        %1493 = vmatpush.xpose.msra.mxu0 0.0
        %1494 = vmatpush.xpose.msra.mxu0 0.0
        %1495 = vmatpush.xpose.msra.mxu0 0.0
        %1496 = vmatpush.xpose.msra.mxu0 %v1479
        %1497 = vmatmul.f32.gmra.mxu0 %v1476
        %v1498 = vpop.f32.mrf.mxu0
        %v1499 = vadd.f32 0.0, %v1498
        %1500 = vdwg.mxu0
        %v1502 = vsel %vm947, %v1407, 0
        %v1505 = vsel %vm947, %v1411, 0
        %1507 = vmatpush.xpose.msra.mxu0 0.0
        %1508 = vmatpush.xpose.msra.mxu0 0.0
        %1509 = vmatpush.xpose.msra.mxu0 0.0
        %1510 = vmatpush.xpose.msra.mxu0 0.0
        %1511 = vmatpush.xpose.msra.mxu0 0.0
        %1512 = vmatpush.xpose.msra.mxu0 0.0
        %1513 = vmatpush.xpose.msra.mxu0 0.0
        %1514 = vmatpush.xpose.msra.mxu0 0.0
        %1515 = vmatpush.xpose.msra.mxu0 0.0
        %1516 = vmatpush.xpose.msra.mxu0 0.0
        %1517 = vmatpush.xpose.msra.mxu0 0.0
        %1518 = vmatpush.xpose.msra.mxu0 0.0
        %1519 = vmatpush.xpose.msra.mxu0 0.0
        %1520 = vmatpush.xpose.msra.mxu0 0.0
        %1521 = vmatpush.xpose.msra.mxu0 0.0
        %1522 = vmatpush.xpose.msra.mxu0 %v1505
        %1523 = vmatmul.f32.gmra.mxu0 %v1502
        %v1524 = vpop.f32.mrf.mxu0
        %v1525 = vadd.f32 0.0, %v1524
        %1526 = vdwg.mxu0
        %v1527 = vsel %vm1417, 16843009, 0
        %v1528 = vunpack.c.0.s8 %v1527
        %vm1529 = vcmp.ne.s32.totalorder %v1528, 0
        %v1530 = vsel %vm1529, 1, 0
        %vm1531 = vcmp.eq.s32.totalorder %v1530, 1
        %v1532 = vsel %vm1531, %v1447, -1e+20
        %v1533 = vsel %vm1531, %v1473, -1e+20
        %v1534 = vsel %vm1531, %v1499, -1e+20
        %v1535 = vsel %vm1531, %v1525, -1e+20
        %v1536 = vsel %vm947, %v1532, -inf
        %1537 = vmax.xlane.f32.xlu0 %v1536
        %v1538 = vpop.xlane.xlu0 %1537
        %v1539 = vsel %vm947, %v1533, -inf
        %1540 = vmax.xlane.f32.xlu0 %v1539
        %v1541 = vpop.xlane.xlu0 %1540
        %v1542 = vsel %vm947, %v1534, -inf
        %1543 = vmax.xlane.f32.xlu0 %v1542
        %v1544 = vpop.xlane.xlu0 %1543
        %v1545 = vsel %vm947, %v1535, -inf
        %1546 = vmax.xlane.f32.xlu0 %v1545
        %v1547 = vpop.xlane.xlu0 %1546
        %v1548 = vsub.f32 %v1532, %v1538
        %v1549 = vsub.f32 %v1533, %v1541
        %v1550 = vsub.f32 %v1534, %v1544
        %v1551 = vsub.f32 %v1535, %v1547
        %v1552 = vmul.f32 %v1548, 1.442695
        %v1553 = vpow.pop %v1552
        %v1554 = vmul.f32 %v1549, 1.442695
        %v1555 = vpow.pop %v1554
        %v1556 = vmul.f32 %v1550, 1.442695
        %v1557 = vpow.pop %v1556
        %v1558 = vmul.f32 %v1551, 1.442695
        %v1559 = vpow.pop %v1558
        %v1560 = vsel %vm947, %v1553, 0.0
        %1561 = vadd.xlane.f32.xlu0 %v1560
        %v1562 = vpop.xlane.xlu0 %1561
        %v1563 = vsel %vm947, %v1555, 0.0
        %1564 = vadd.xlane.f32.xlu0 %v1563
        %v1565 = vpop.xlane.xlu0 %1564
        %v1566 = vsel %vm947, %v1557, 0.0
        %1567 = vadd.xlane.f32.xlu0 %v1566
        %v1568 = vpop.xlane.xlu0 %1567
        %v1569 = vsel %vm947, %v1559, 0.0
        %1570 = vadd.xlane.f32.xlu0 %v1569
        %v1571 = vpop.xlane.xlu0 %1570
        %v1572 = vrcp.pop %v1562
        %v1573 = vmul.f32 %v1562, %v1572
        %v1574 = vsub.f32 1.0, %v1573
        %v1575 = vmul.f32 %v1572, %v1574
        %v1576 = vadd.f32 %v1572, %v1575
        %vm1577 = vweird.f32 %v1562
        %vm1578 = vweird.f32 %v1572
        %vm1579 = vmor %vm1577, %vm1578
        %v1580 = vsel %vm1579, %v1572, %v1576
        %v1581 = vand.u32 2147483647, %v1562
        %vm1582 = vcmp.eq.f32.partialorder %v1581, 8.507059e+37
        %v1583 = vand.u32 %v1562, 2147483648
        %v1584 = vor.u32 1.1754944e-38, %v1583
        %v1585 = vsel %vm1582, %v1584, %v1580
        %v1586 = vrcp.pop %v1565
        %v1587 = vmul.f32 %v1565, %v1586
        %v1588 = vsub.f32 1.0, %v1587
        %v1589 = vmul.f32 %v1586, %v1588
        %v1590 = vadd.f32 %v1586, %v1589
        %vm1591 = vweird.f32 %v1565
        %vm1592 = vweird.f32 %v1586
        %vm1593 = vmor %vm1591, %vm1592
        %v1594 = vsel %vm1593, %v1586, %v1590
        %v1595 = vand.u32 2147483647, %v1565
        %vm1596 = vcmp.eq.f32.partialorder %v1595, 8.507059e+37
        %v1597 = vand.u32 %v1565, 2147483648
        %v1598 = vor.u32 1.1754944e-38, %v1597
        %v1599 = vsel %vm1596, %v1598, %v1594
        %v1600 = vrcp.pop %v1568
        %v1601 = vmul.f32 %v1568, %v1600
        %v1602 = vsub.f32 1.0, %v1601
        %v1603 = vmul.f32 %v1600, %v1602
        %v1604 = vadd.f32 %v1600, %v1603
        %vm1605 = vweird.f32 %v1568
        %vm1606 = vweird.f32 %v1600
        %vm1607 = vmor %vm1605, %vm1606
        %v1608 = vsel %vm1607, %v1600, %v1604
        %v1609 = vand.u32 2147483647, %v1568
        %vm1610 = vcmp.eq.f32.partialorder %v1609, 8.507059e+37
        %v1611 = vand.u32 %v1568, 2147483648
        %v1612 = vor.u32 1.1754944e-38, %v1611
        %v1613 = vsel %vm1610, %v1612, %v1608
        %v1614 = vrcp.pop %v1571
        %v1615 = vmul.f32 %v1571, %v1614
        %v1616 = vsub.f32 1.0, %v1615
        %v1617 = vmul.f32 %v1614, %v1616
        %v1618 = vadd.f32 %v1614, %v1617
        %vm1619 = vweird.f32 %v1571
        %vm1620 = vweird.f32 %v1614
        %vm1621 = vmor %vm1619, %vm1620
        %v1622 = vsel %vm1621, %v1614, %v1618
        %v1623 = vand.u32 2147483647, %v1571
        %vm1624 = vcmp.eq.f32.partialorder %v1623, 8.507059e+37
        %v1625 = vand.u32 %v1571, 2147483648
        %v1626 = vor.u32 1.1754944e-38, %v1625
        %v1627 = vsel %vm1624, %v1626, %v1622
        %v1628 = vmul.f32 %v1553, %v1585
        %v1629 = vmul.f32 %v1555, %v1599
        %v1630 = vmul.f32 %v1557, %v1613
        %v1631 = vmul.f32 %v1559, %v1627
        %v1633 = vsel %vm947, %v1628, 0
        %1635 = vmatpush.msra.mxu0 0.0
        %1636 = vmatpush.msra.mxu0 0.0
        %1637 = vmatpush.msra.mxu0 0.0
        %1638 = vmatpush.msra.mxu0 0.0
        %1639 = vmatpush.msra.mxu0 0.0
        %1640 = vmatpush.msra.mxu0 0.0
        %1641 = vmatpush.msra.mxu0 0.0
        %1642 = vmatpush.msra.mxu0 0.0
        %1643 = vmatpush.msra.mxu0 0.0
        %1644 = vmatpush.msra.mxu0 0.0
        %1645 = vmatpush.msra.mxu0 0.0
        %1646 = vmatpush.msra.mxu0 0.0
        %1647 = vmatpush.msra.mxu0 0.0
        %1648 = vmatpush.msra.mxu0 0.0
        %1649 = vmatpush.msra.mxu0 0.0
        %1650 = vmatpush.msra.mxu0 %v1412
        %1651 = vmatmul.f32.gmra.mxu0 %v1633
        %v1652 = vpop.f32.mrf.mxu0
        %v1653 = vadd.f32 0.0, %v1652
        %1654 = vdwg.mxu0
        %v1656 = vsel %vm947, %v1629, 0
        %1658 = vmatpush.msra.mxu0 0.0
        %1659 = vmatpush.msra.mxu0 0.0
        %1660 = vmatpush.msra.mxu0 0.0
        %1661 = vmatpush.msra.mxu0 0.0
        %1662 = vmatpush.msra.mxu0 0.0
        %1663 = vmatpush.msra.mxu0 0.0
        %1664 = vmatpush.msra.mxu0 0.0
        %1665 = vmatpush.msra.mxu0 0.0
        %1666 = vmatpush.msra.mxu0 0.0
        %1667 = vmatpush.msra.mxu0 0.0
        %1668 = vmatpush.msra.mxu0 0.0
        %1669 = vmatpush.msra.mxu0 0.0
        %1670 = vmatpush.msra.mxu0 0.0
        %1671 = vmatpush.msra.mxu0 0.0
        %1672 = vmatpush.msra.mxu0 0.0
        %1673 = vmatpush.msra.mxu0 %v1413
        %1674 = vmatmul.f32.gmra.mxu0 %v1656
        %v1675 = vpop.f32.mrf.mxu0
        %v1676 = vadd.f32 0.0, %v1675
        %1677 = vdwg.mxu0
        %v1679 = vsel %vm947, %v1630, 0
        %1681 = vmatpush.msra.mxu0 0.0
        %1682 = vmatpush.msra.mxu0 0.0
        %1683 = vmatpush.msra.mxu0 0.0
        %1684 = vmatpush.msra.mxu0 0.0
        %1685 = vmatpush.msra.mxu0 0.0
        %1686 = vmatpush.msra.mxu0 0.0
        %1687 = vmatpush.msra.mxu0 0.0
        %1688 = vmatpush.msra.mxu0 0.0
        %1689 = vmatpush.msra.mxu0 0.0
        %1690 = vmatpush.msra.mxu0 0.0
        %1691 = vmatpush.msra.mxu0 0.0
        %1692 = vmatpush.msra.mxu0 0.0
        %1693 = vmatpush.msra.mxu0 0.0
        %1694 = vmatpush.msra.mxu0 0.0
        %1695 = vmatpush.msra.mxu0 0.0
        %1696 = vmatpush.msra.mxu0 %v1414
        %1697 = vmatmul.f32.gmra.mxu0 %v1679
        %v1698 = vpop.f32.mrf.mxu0
        %v1699 = vadd.f32 0.0, %v1698
        %1700 = vdwg.mxu0
        %v1702 = vsel %vm947, %v1631, 0
        %1704 = vmatpush.msra.mxu0 0.0
        %1705 = vmatpush.msra.mxu0 0.0
        %1706 = vmatpush.msra.mxu0 0.0
        %1707 = vmatpush.msra.mxu0 0.0
        %1708 = vmatpush.msra.mxu0 0.0
        %1709 = vmatpush.msra.mxu0 0.0
        %1710 = vmatpush.msra.mxu0 0.0
        %1711 = vmatpush.msra.mxu0 0.0
        %1712 = vmatpush.msra.mxu0 0.0
        %1713 = vmatpush.msra.mxu0 0.0
        %1714 = vmatpush.msra.mxu0 0.0
        %1715 = vmatpush.msra.mxu0 0.0
        %1716 = vmatpush.msra.mxu0 0.0
        %1717 = vmatpush.msra.mxu0 0.0
        %1718 = vmatpush.msra.mxu0 0.0
        %1719 = vmatpush.msra.mxu0 %v1415
        %1720 = vmatmul.f32.gmra.mxu0 %v1702
        %v1721 = vpop.f32.mrf.mxu0
        %v1722 = vadd.f32 0.0, %v1721
        %1723 = vdwg.mxu0
        %v1725 = vsel %vm947, %v1653, 0
        %1727 = vmatpush.msra.mxu0 0.0
        %1728 = vmatpush.msra.mxu0 0.0
        %1729 = vmatpush.msra.mxu0 0.0
        %1730 = vmatpush.msra.mxu0 0.0
        %1731 = vmatpush.msra.mxu0 0.0
        %1732 = vmatpush.msra.mxu0 0.0
        %1733 = vmatpush.msra.mxu0 0.0
        %1734 = vmatpush.msra.mxu0 0.0
        %1735 = vmatpush.msra.mxu0 0.0
        %1736 = vmatpush.msra.mxu0 0.0
        %1737 = vmatpush.msra.mxu0 0.0
        %1738 = vmatpush.msra.mxu0 0.0
        %1739 = vmatpush.msra.mxu0 0.0
        %1740 = vmatpush.msra.mxu0 0.0
        %1741 = vmatpush.msra.mxu0 0.0
        %1742 = vmatpush.msra.mxu0 %v1418
        %1743 = vmatmul.f32.gmra.mxu0 %v1725
        %v1744 = vpop.f32.mrf.mxu0
        %v1745 = vadd.f32 0.0, %v1744
        %1746 = vdwg.mxu0
        %v1748 = vsel %vm947, %v1676, 0
        %1750 = vmatpush.msra.mxu0 0.0
        %1751 = vmatpush.msra.mxu0 0.0
        %1752 = vmatpush.msra.mxu0 0.0
        %1753 = vmatpush.msra.mxu0 0.0
        %1754 = vmatpush.msra.mxu0 0.0
        %1755 = vmatpush.msra.mxu0 0.0
        %1756 = vmatpush.msra.mxu0 0.0
        %1757 = vmatpush.msra.mxu0 0.0
        %1758 = vmatpush.msra.mxu0 0.0
        %1759 = vmatpush.msra.mxu0 0.0
        %1760 = vmatpush.msra.mxu0 0.0
        %1761 = vmatpush.msra.mxu0 0.0
        %1762 = vmatpush.msra.mxu0 0.0
        %1763 = vmatpush.msra.mxu0 0.0
        %1764 = vmatpush.msra.mxu0 0.0
        %1765 = vmatpush.msra.mxu0 %v1419
        %1766 = vmatmul.f32.gmra.mxu0 %v1748
        %v1767 = vpop.f32.mrf.mxu0
        %v1768 = vadd.f32 0.0, %v1767
        %1769 = vdwg.mxu0
        %v1771 = vsel %vm947, %v1699, 0
        %1773 = vmatpush.msra.mxu0 0.0
        %1774 = vmatpush.msra.mxu0 0.0
        %1775 = vmatpush.msra.mxu0 0.0
        %1776 = vmatpush.msra.mxu0 0.0
        %1777 = vmatpush.msra.mxu0 0.0
        %1778 = vmatpush.msra.mxu0 0.0
        %1779 = vmatpush.msra.mxu0 0.0
        %1780 = vmatpush.msra.mxu0 0.0
        %1781 = vmatpush.msra.mxu0 0.0
        %1782 = vmatpush.msra.mxu0 0.0
        %1783 = vmatpush.msra.mxu0 0.0
        %1784 = vmatpush.msra.mxu0 0.0
        %1785 = vmatpush.msra.mxu0 0.0
        %1786 = vmatpush.msra.mxu0 0.0
        %1787 = vmatpush.msra.mxu0 0.0
        %1788 = vmatpush.msra.mxu0 %v1420
        %1789 = vmatmul.f32.gmra.mxu0 %v1771
        %v1790 = vpop.f32.mrf.mxu0
        %v1791 = vadd.f32 0.0, %v1790
        %1792 = vdwg.mxu0
        %v1794 = vsel %vm947, %v1722, 0
        %1796 = vmatpush.msra.mxu0 0.0
        %1797 = vmatpush.msra.mxu0 0.0
        %1798 = vmatpush.msra.mxu0 0.0
        %1799 = vmatpush.msra.mxu0 0.0
        %1800 = vmatpush.msra.mxu0 0.0
        %1801 = vmatpush.msra.mxu0 0.0
        %1802 = vmatpush.msra.mxu0 0.0
        %1803 = vmatpush.msra.mxu0 0.0
        %1804 = vmatpush.msra.mxu0 0.0
        %1805 = vmatpush.msra.mxu0 0.0
        %1806 = vmatpush.msra.mxu0 0.0
        %1807 = vmatpush.msra.mxu0 0.0
        %1808 = vmatpush.msra.mxu0 0.0
        %1809 = vmatpush.msra.mxu0 0.0
        %1810 = vmatpush.msra.mxu0 0.0
        %1811 = vmatpush.msra.mxu0 %v1421
        %1812 = vmatmul.f32.gmra.mxu0 %v1794
        %v1813 = vpop.f32.mrf.mxu0
        %v1814 = vadd.f32 0.0, %v1813
        %1815 = vdwg.mxu0
        %v1816 = vsel %vm1341, %v1745, 0.0
        %v1817 = vsel %vm1341, %v1768, 0.0
        %v1818 = vadd.f32 %v1816, %v1817
        %v1819 = vsel %vm1341, %v1791, 0.0
        %v1820 = vadd.f32 %v1818, %v1819
        %v1821 = vsel %vm1341, %v1814, 0.0
        %v1822 = vadd.f32 %v1820, %v1821
        %v1824 = vperm.slane %v1422, 0
        %v1826 = vadd.f32 %v1822, %v1824
        %v1827 = vadd.f32 %v1393, %v1826
        %v1828 = vld [vmem:[%s12] sm:$0x1]
        %v1829 = vld [vmem:[%s13] sm:$0x1]
        %v1830 = vsel %vm1341, %v1827, 0.0
        %1831 = vadd.xlane.f32.xlu0 %v1830
        %v1832 = vpop.xlane.xlu0 %1831
        %v1833 = vmul.f32 %v1832, %v1366
        %v1834 = vsub.f32 %v1827, %v1833
        %v1835 = vmul.f32 %v1834, %v1834
        %v1836 = vsel %vm1341, %v1835, 0.0
        %1837 = vadd.xlane.f32.xlu0 %v1836
        %v1838 = vpop.xlane.xlu0 %1837
        %v1839 = vmul.f32 %v1838, %v1366
        %v1840 = vadd.f32 %v1839, 1e-05
        %v1841 = vrsqrt.pop %v1840
        %v1842 = vmul.f32 %v1841, %v1840
        %v1843 = vmul.f32 %v1842, %v1841
        %v1844 = vmul.f32 0.5, %v1843
        %v1845 = vsub.f32 1.5, %v1844
        %v1846 = vmul.f32 %v1841, %v1845
        %vm1847 = vweird.f32 %v1840
        %vm1848 = vweird.f32 %v1841
        %vm1849 = vmor %vm1847, %vm1848
        %v1850 = vsel %vm1849, %v1841, %v1846
        %v1851 = vmul.f32 %v1834, %v1850
        %v1853 = vperm.slane %v1828, 0
        %v1855 = vmul.f32 %v1851, %v1853
        %v1857 = vperm.slane %v1829, 0
        %v1859 = vadd.f32 %v1855, %v1857
        %v1860 = vld [vmem:[#allocation13] sm:$0xff]
        %v1861 = vld [vmem:[#allocation13 + $0x8] sm:$0xff]
        %v1862 = vld [vmem:[#allocation13 + $0x10] sm:$0xff]
        %v1863 = vld [vmem:[#allocation13 + $0x18] sm:$0xff]
        %v1864 = vld [vmem:[%s15] sm:$0x1]
        %v1866 = vperm.slane %v1864, 0
        %v1869 = vsel %vm1341, %v1859, 0
        %1871 = vmatpush.msra.mxu0 0.0
        %1872 = vmatpush.msra.mxu0 0.0
        %1873 = vmatpush.msra.mxu0 0.0
        %1874 = vmatpush.msra.mxu0 0.0
        %1875 = vmatpush.msra.mxu0 0.0
        %1876 = vmatpush.msra.mxu0 0.0
        %1877 = vmatpush.msra.mxu0 0.0
        %1878 = vmatpush.msra.mxu0 0.0
        %1879 = vmatpush.msra.mxu0 0.0
        %1880 = vmatpush.msra.mxu0 0.0
        %1881 = vmatpush.msra.mxu0 0.0
        %1882 = vmatpush.msra.mxu0 0.0
        %1883 = vmatpush.msra.mxu0 %v1863
        %1884 = vmatpush.msra.mxu0 %v1862
        %1885 = vmatpush.msra.mxu0 %v1861
        %1886 = vmatpush.msra.mxu0 %v1860
        %1887 = vmatmul.f32.gmra.mxu0 %v1869
        %v1888 = vpop.f32.mrf.mxu0
        %v1889 = vadd.f32 %v1866, %v1888
        %1890 = vdwg.mxu0
        %v1891 = vmax.f32 %v1889, 0.0
        %v1892 = vld [vmem:[%s16] sm:$0xff]
        %v1893 = vld [vmem:[%s16 + $0x8] sm:$0xff]
        %v1894 = vld [vmem:[%s16 + $0x10] sm:$0xff]
        %v1895 = vld [vmem:[%s16 + $0x18] sm:$0xff]
        %v1896 = vld [vmem:[%s16 + $0x20] sm:$0xff]
        %v1897 = vld [vmem:[%s16 + $0x28] sm:$0xff]
        %v1898 = vld [vmem:[%s16 + $0x30] sm:$0xff]
        %v1899 = vld [vmem:[%s16 + $0x38] sm:$0xff]
        %v1900 = vld [vmem:[%s16 + $0x40] sm:$0xff]
        %v1901 = vld [vmem:[%s16 + $0x48] sm:$0xff]
        %v1902 = vld [vmem:[%s16 + $0x50] sm:$0xff]
        %v1903 = vld [vmem:[%s16 + $0x58] sm:$0xff]
        %v1904 = vld [vmem:[%s16 + $0x60] sm:$0xff]
        %v1905 = vld [vmem:[%s16 + $0x68] sm:$0xff]
        %v1906 = vld [vmem:[%s16 + $0x70] sm:$0xff]
        %v1907 = vld [vmem:[%s16 + $0x78] sm:$0xff]
        %v1908 = vld [vmem:[%s17] sm:$0x1]
        %v1910 = vperm.slane %v1908, 0
        %1912 = vmatpush.msra.mxu0 %v1907
        %1913 = vmatpush.msra.mxu0 %v1906
        %1914 = vmatpush.msra.mxu0 %v1905
        %1915 = vmatpush.msra.mxu0 %v1904
        %1916 = vmatpush.msra.mxu0 %v1903
        %1917 = vmatpush.msra.mxu0 %v1902
        %1918 = vmatpush.msra.mxu0 %v1901
        %1919 = vmatpush.msra.mxu0 %v1900
        %1920 = vmatpush.msra.mxu0 %v1899
        %1921 = vmatpush.msra.mxu0 %v1898
        %1922 = vmatpush.msra.mxu0 %v1897
        %1923 = vmatpush.msra.mxu0 %v1896
        %1924 = vmatpush.msra.mxu0 %v1895
        %1925 = vmatpush.msra.mxu0 %v1894
        %1926 = vmatpush.msra.mxu0 %v1893
        %1927 = vmatpush.msra.mxu0 %v1892
        %1928 = vmatmul.f32.gmra.mxu0 %v1891
        %v1929 = vpop.f32.mrf.mxu0
        %v1930 = vadd.f32 %v1910, %v1929
        %1931 = vdwg.mxu0
        %v1932 = vadd.f32 %v1859, %v1930
        %v1933 = vld [vmem:[%s18] sm:$0x1]
        %v1934 = vld [vmem:[%s19] sm:$0x1]
        %v1935 = vsel %vm1341, %v1932, 0.0
        %1936 = vadd.xlane.f32.xlu0 %v1935
        %v1937 = vpop.xlane.xlu0 %1936
        %v1938 = vmul.f32 %v1937, %v1366
        %v1939 = vsub.f32 %v1932, %v1938
        %v1940 = vmul.f32 %v1939, %v1939
        %v1941 = vsel %vm1341, %v1940, 0.0
        %1942 = vadd.xlane.f32.xlu0 %v1941
        %v1943 = vpop.xlane.xlu0 %1942
        %v1944 = vmul.f32 %v1943, %v1366
        %v1945 = vadd.f32 %v1944, 1e-05
        %v1946 = vrsqrt.pop %v1945
        %v1947 = vmul.f32 %v1946, %v1945
        %v1948 = vmul.f32 %v1947, %v1946
        %v1949 = vmul.f32 0.5, %v1948
        %v1950 = vsub.f32 1.5, %v1949
        %v1951 = vmul.f32 %v1946, %v1950
        %vm1952 = vweird.f32 %v1945
        %vm1953 = vweird.f32 %v1946
        %vm1954 = vmor %vm1952, %vm1953
        %v1955 = vsel %vm1954, %v1946, %v1951
        %v1956 = vmul.f32 %v1939, %v1955
        %v1958 = vperm.slane %v1933, 0
        %v1960 = vmul.f32 %v1956, %v1958
        %v1962 = vperm.slane %v1934, 0
        %v1964 = vadd.f32 %v1960, %v1962
        %1965 = vst.msk [vmem:[%s929] sm:$0xff] %vm1341, %v1964
        %s1966 = sand.u32 %s502, 1
        %s1967 = scalar_lea.sflag [#allocation4], %s1966
        %s1968 = sand.u32 %s502, 1
        %s1969 = smul.addr %s1968, 8
        %s1970 = scalar_lea.vmem [#allocation15], %s1969
        // Predicated region
        $region201: #{tpu_custom_call.1} parent=167 // pred_check
          %p1971 = pneg %p512
        $region202: #{tpu_custom_call.1} parent=167 // pred_check_branch
          %1973 = sbr.rel (%p1971) target = $region204
        $region203: #{tpu_custom_call.1} parent=167 // pred_region
          %1975 = vsyncadd %s1967, 0
          %s1976 = smul.addr %s44, 8
          %s1977 = scalar_lea.hbm %s20, %s1976
          %s1979 = sshll.u32 %s1970, 4
          %s1980 = int_to_ptr.vmem [resolvable:$true] %s1979
          %s1981 = sshll.u32 %s1977, 4
          %s1982 = int_to_ptr.hbm [resolvable:$true] %s1981
          %1984 = dma.vmem_to_hbm [thread:$0]  %s1980, 128, %s1982, %s1967
        $region204: #{tpu_custom_call.1} parent=167 // pred_fallthru
          _
      $region168: #{tpu_custom_call.1} parent=5 // pred_fallthru
        _
      %p1985 = scmp.le.s32.totalorder 2, %s39
      // Predicated region
      $region205: #{tpu_custom_call.1} parent=5 // pred_check
        %p1986 = pneg %p1985
      $region206: #{tpu_custom_call.1} parent=5 // pred_check_branch
        %1988 = sbr.rel (%p1986) target = $region208
      $region207: #{tpu_custom_call.1} parent=5 // pred_region
        %s1989 = ssub.s32 %s39, 2
        // Predicated region
        $region209: #{tpu_custom_call.1} parent=207 // pred_check
          %p1990 = pneg %p518
        $region210: #{tpu_custom_call.1} parent=207 // pred_check_branch
          %1992 = sbr.rel (%p1990) target = $region212
        $region211: #{tpu_custom_call.1} parent=207 // pred_region
          %s1993 = sand.u32 %s503, 1
          %s1994 = scalar_lea.sflag [#allocation4], %s1993
          %s1995 = sand.u32 %s503, 1
          %s1996 = smul.addr %s1995, 8
          %s1997 = scalar_lea.vmem [#allocation15], %s1996
          %1999 = dma.done %s1994, 128
        $region212: #{tpu_custom_call.1} parent=207 // pred_fallthru
          _
      $region208: #{tpu_custom_call.1} parent=5 // pred_fallthru
        _
    $region6: #{tpu_custom_call.1} parent=1 // loop_footer
      %s43 = sadd.s32 1, %s39
    $region7: #{tpu_custom_call.1} parent=1 // loop_footer_branch
      %38 = sbr.rel target = $region3
    $region8: #{tpu_custom_call.1} parent=1 // loop_exit
      _
    %2000 = vsyncpa [#allocation3], 1
    %s2001 = scalar_lea.sflag [#allocation3], 1
    %2002 = vsyncpa %s2001, 1
    %2003 = vsyncpa [#allocation8], 1
    %s2004 = scalar_lea.sflag [#allocation8], 1
    %2005 = vsyncpa %s2004, 1
    %2006 = vsyncpa [#allocation11], 1
    %s2007 = scalar_lea.sflag [#allocation11], 1
    %2008 = vsyncpa %s2007, 1
    %2009 = vsyncpa [#allocation14], 1
    %2010 = vsyncpa [#allocation4], 1
    %s2011 = scalar_lea.sflag [#allocation4], 1
    %2012 = vsyncpa %s2011, 1

</llo_original>
